<compile_context>
chip_gen: v6e
topology: v6e:2x2x1
jax: 0.10.0
libtpu: 0.0.40
codegen_flags: <defaults>
</compile_context>

<pallas_src>
import functools

import jax
import jax.numpy as jnp
from jax.experimental import pallas as pl
from jax.experimental.pallas import tpu as pltpu


def block_kernel(x_ref,
                 ln1_g_ref, ln1_b_ref, ln2_g_ref, ln2_b_ref,
                 wq_ref, wk_ref, wv_ref, wo_ref, bo_ref,
                 w1_ref, b1_ref, w2_ref, b2_ref,
                 o_ref, *, n_head, q_tile):
    T, C = x_ref.shape[1], x_ref.shape[2]
    hs = C // n_head
    TQ = q_tile
    eps = 1e-5                      # PyTorch LayerNorm default
    scale = hs ** -0.5
    bf16 = jnp.bfloat16

    q0 = pl.multiple_of(pl.program_id(1) * TQ, TQ)

    def layernorm(v, g, b):
        # single-pass variance: E[v^2] - mu^2 (one cross-lane reduce per stat)
        mu = jnp.mean(v, axis=-1, keepdims=True)
        var = jnp.mean(v * v, axis=-1, keepdims=True) - mu * mu
        return (v - mu) * jax.lax.rsqrt(var + eps) * g + b

    # ---------------- self-attention branch ----------------
    x_q = x_ref[0, pl.ds(q0, TQ), :].astype(jnp.float32)    # (TQ, C) query rows / residual
    x_full = x_ref[0].astype(jnp.float32)                   # (T, C) for keys / values

    ln1_g = ln1_g_ref[...]
    ln1_b = ln1_b_ref[...]
    h_q = layernorm(x_q, ln1_g, ln1_b)                       # (TQ, C) f32
    h_full = layernorm(x_full, ln1_g, ln1_b)                 # (T, C)  f32

    # bf16 MXU operands, f32 accumulation
    hq_b = h_q.astype(bf16)
    hf_b = h_full.astype(bf16)
    q = jnp.dot(hq_b, wq_ref[...], preferred_element_type=jnp.float32)   # (TQ, C)
    k = jnp.dot(hf_b, wk_ref[...], preferred_element_type=jnp.float32)   # (T, C)
    v = jnp.dot(hf_b, wv_ref[...], preferred_element_type=jnp.float32)   # (T, C)

    row = jax.lax.broadcasted_iota(jnp.int32, (TQ, T), 0) + q0
    col = jax.lax.broadcasted_iota(jnp.int32, (TQ, T), 1)
    causal = col <= row

    q_b = (q * scale).astype(bf16)
    k_b = k.astype(bf16)
    v_b = v.astype(bf16)

    head_outs = []
    for head in range(n_head):
        sl = slice(head * hs, (head + 1) * hs)
        # q_h @ k_h^T expressed as dot_general (contract last dims) -> no
        # explicit transpose materialization
        s = jax.lax.dot_general(q_b[:, sl], k_b[:, sl],
                                (((1,), (1,)), ((), ())),
                                preferred_element_type=jnp.float32)       # (TQ, T)
        s = jnp.where(causal, s, -jnp.inf)
        m = jnp.max(s, axis=-1, keepdims=True)
        p = jnp.exp(s - m)                                                # f32
        l = jnp.sum(p, axis=-1, keepdims=True)
        o_h = jnp.dot(p.astype(bf16), v_b[:, sl],
                      preferred_element_type=jnp.float32)                 # (TQ, hs)
        # normalize the small (TQ, hs) tensor with an EUP reciprocal
        head_outs.append(o_h * pl.reciprocal(l, approx=True))

    attn = jnp.concatenate(head_outs, axis=-1)                            # (TQ, C)
    # single full-K output projection (fused heads)
    proj = jnp.dot(attn.astype(bf16), wo_ref[...],
                   preferred_element_type=jnp.float32) + bo_ref[...]
    x_q = x_q + proj                                # dropout = identity (eval)

    # ---------------- feed-forward branch ----------------
    h2 = layernorm(x_q, ln2_g_ref[...], ln2_b_ref[...])
    h2_b = h2.astype(bf16)
    Hd = w1_ref.shape[1]                            # 4*C
    chunk = Hd if (Hd <= 2048 or Hd % 2048 != 0) else 2048
    ff = jnp.zeros((TQ, C), jnp.float32)
    for c0 in range(0, Hd, chunk):
        w1c = w1_ref[:, c0:c0 + chunk]
        b1c = b1_ref[:, c0:c0 + chunk]
        fc = jnp.dot(h2_b, w1c, preferred_element_type=jnp.float32) + b1c
        fc = jnp.maximum(fc, 0.0)                   # ReLU (f32 on VPU)
        ff = ff + jnp.dot(fc.astype(bf16), w2_ref[c0:c0 + chunk, :],
                          preferred_element_type=jnp.float32)
    x_q = x_q + ff + b2_ref[...]

    o_ref[0] = x_q.astype(o_ref.dtype)


def transformer_block(x, params, n_head):
    B, T, C = x.shape
    (ln1_g, ln1_b, ln2_g, ln2_b, wq, wk, wv, wo, bo, w1, b1, w2, b2) = params

    # store matmul weights in bf16 (halves HBM->VMEM DMA); LN params / biases
    # stay f32 since elementwise math is kept f32 (v5e has no bf16 VPU/EUP).
    wq, wk, wv, wo, w1, w2 = (w.astype(jnp.bfloat16)
                              for w in (wq, wk, wv, wo, w1, w2))
    H = w1.shape[1]                                 # 4*C

    # query-tile the sequence: (TQ, T) scores instead of (T, T), and a second
    # parallel grid axis (helps v7x's 2 TensorCores when B is small).
    if T > 256 and T % 256 == 0:
        TQ = 256
    else:
        TQ = T
    nq = T // TQ

    def wspec(shape):
        return pl.BlockSpec(shape, lambda b, qt: (0, 0))

    in_specs = [
        pl.BlockSpec((1, T, C), lambda b, qt: (b, 0, 0)),   # x (full seq per batch)
        wspec((1, C)), wspec((1, C)),                       # ln1 gamma/beta
        wspec((1, C)), wspec((1, C)),                       # ln2 gamma/beta
        wspec((C, C)), wspec((C, C)), wspec((C, C)),        # Wq, Wk, Wv (bf16)
        wspec((C, C)), wspec((1, C)),                       # Wo (bf16), bo
        wspec((C, H)), wspec((1, H)),                       # W1 (bf16), b1
        wspec((H, C)), wspec((1, C)),                       # W2 (bf16), b2
    ]
    out_spec = pl.BlockSpec((1, TQ, C), lambda b, qt: (b, qt, 0))

    # generous VMEM estimate (bytes): bf16 weights + double-buffered x/out
    # blocks + f32 intermediates, 2x headroom, capped below v7x's 64 MiB.
    est = (2 * (4 * C * C + 2 * C * H)              # bf16 weights
           + 4 * (6 * C + H)                        # f32 ln params / biases
           + 4 * (2 * T * C + 2 * TQ * C)           # double-buffered x / out
           + 4 * (4 * T * C + TQ * T + 10 * TQ * C + TQ * min(H, 2048)))
    vmem_limit = int(min(max(2 * est, 32 * 1024 * 1024), 56 * 1024 * 1024))

    return pl.pallas_call(
        functools.partial(block_kernel, n_head=n_head, q_tile=TQ),
        out_shape=jax.ShapeDtypeStruct((B, T, C), x.dtype),
        grid=(B, nq),
        in_specs=in_specs,
        out_specs=out_spec,
        compiler_params=pltpu.CompilerParams(
            dimension_semantics=("parallel", "parallel"),
            vmem_limit_bytes=vmem_limit),
    )(x, ln1_g, ln1_b, ln2_g, ln2_b, wq, wk, wv, wo, bo, w1, b1, w2, b2)


def reference_block(x, params, n_head):
    (ln1_g, ln1_b, ln2_g, ln2_b, wq, wk, wv, wo, bo, w1, b1, w2, b2) = params
    eps = 1e-5

    def ln(v, g, b):
        mu = jnp.mean(v, -1, keepdims=True)
        var = jnp.mean((v - mu) ** 2, -1, keepdims=True)
        return (v - mu) * jax.lax.rsqrt(var + eps) * g + b

    B, T, C = x.shape
    hs = C // n_head
    h = ln(x, ln1_g, ln1_b)
    q = (h @ wq).reshape(B, T, n_head, hs).transpose(0, 2, 1, 3)
    k = (h @ wk).reshape(B, T, n_head, hs).transpose(0, 2, 1, 3)
    v = (h @ wv).reshape(B, T, n_head, hs).transpose(0, 2, 1, 3)
    s = jnp.einsum("bhqd,bhkd->bhqk", q, k) * (hs ** -0.5)
    mask = jnp.tril(jnp.ones((T, T), bool))
    s = jnp.where(mask, s, -jnp.inf)
    p = jax.nn.softmax(s, axis=-1)
    o = jnp.einsum("bhqk,bhkd->bhqd", p, v).transpose(0, 2, 1, 3).reshape(B, T, C)
    x = x + o @ wo + bo
    h2 = ln(x, ln2_g, ln2_b)
    f = jnp.maximum(h2 @ w1 + b1, 0.0) @ w2 + b2
    return x + f


if __name__ == "__main__":
    B, T, C, n_head = 2, 8, 32, 4

    key = jax.random.PRNGKey(0)
    keys = jax.random.split(key, 10)
    x = jax.random.normal(keys[0], (B, T, C), jnp.float32)

    init = lambda k, shape, scale=0.05: scale * jax.random.normal(k, shape, jnp.float32)
    params = (
        jnp.ones((1, C), jnp.float32),       # ln1 gamma
        jnp.zeros((1, C), jnp.float32),      # ln1 beta
        jnp.ones((1, C), jnp.float32),       # ln2 gamma
        jnp.zeros((1, C), jnp.float32),      # ln2 beta
        init(keys[1], (C, C)),               # Wq (no bias)
        init(keys[2], (C, C)),               # Wk
        init(keys[3], (C, C)),               # Wv
        init(keys[4], (C, C)),               # Wo (proj)
        init(keys[5], (1, C)),               # bo
        init(keys[6], (C, 4 * C)),           # W1
        init(keys[7], (1, 4 * C)),           # b1
        init(keys[8], (4 * C, C)),           # W2
        init(keys[9], (1, C)),               # b2
    )

    out = transformer_block(x, params, n_head)
    out = jax.block_until_ready(out)

    ref = reference_block(x, params, n_head)   # full-f32 reference
    assert out.shape == (B, T, C)
    # kernel uses bf16 MXU operands (f32 accumulation) -> tolerance widened
    assert jnp.allclose(out, ref, atol=2e-2, rtol=2e-2), "mismatch vs reference"

    print("KERNEL_OK")
</pallas_src>

<mosaic_0001>
module attributes {stable_mosaic.version = 11 : i64} {
  func.func @block_kernel(%arg0: i32, %arg1: i32, %arg2: memref<1x8x32xf32, #tpu.memory_space<vmem>>, %arg3: memref<1x32xf32, #tpu.memory_space<vmem>>, %arg4: memref<1x32xf32, #tpu.memory_space<vmem>>, %arg5: memref<1x32xf32, #tpu.memory_space<vmem>>, %arg6: memref<1x32xf32, #tpu.memory_space<vmem>>, %arg7: memref<32x32xbf16, #tpu.memory_space<vmem>>, %arg8: memref<32x32xbf16, #tpu.memory_space<vmem>>, %arg9: memref<32x32xbf16, #tpu.memory_space<vmem>>, %arg10: memref<32x32xbf16, #tpu.memory_space<vmem>>, %arg11: memref<1x32xf32, #tpu.memory_space<vmem>>, %arg12: memref<32x128xbf16, #tpu.memory_space<vmem>>, %arg13: memref<1x128xf32, #tpu.memory_space<vmem>>, %arg14: memref<128x32xbf16, #tpu.memory_space<vmem>>, %arg15: memref<1x32xf32, #tpu.memory_space<vmem>>, %arg16: memref<1x8x32xf32, #tpu.memory_space<vmem>>) attributes {dimension_semantics = [#tpu.dimension_semantics<parallel>, #tpu.dimension_semantics<parallel>], iteration_bounds = array<i64: 2, 1>, scalar_prefetch = 0 : i64, scratch_operands = 0 : i64, tpu.core_type = #tpu.core_type<tc>, window_params = [{transform_indices = @transform_0, window_bounds = array<i64: 1, 8, 32>}, {pipeline_mode = #tpu.pipeline_mode<synchronous>, transform_indices = @transform_1, window_bounds = array<i64: 1, 32>}, {pipeline_mode = #tpu.pipeline_mode<synchronous>, transform_indices = @transform_2, window_bounds = array<i64: 1, 32>}, {pipeline_mode = #tpu.pipeline_mode<synchronous>, transform_indices = @transform_3, window_bounds = array<i64: 1, 32>}, {pipeline_mode = #tpu.pipeline_mode<synchronous>, transform_indices = @transform_4, window_bounds = array<i64: 1, 32>}, {pipeline_mode = #tpu.pipeline_mode<synchronous>, transform_indices = @transform_5, window_bounds = array<i64: 32, 32>}, {pipeline_mode = #tpu.pipeline_mode<synchronous>, transform_indices = @transform_6, window_bounds = array<i64: 32, 32>}, {pipeline_mode = #tpu.pipeline_mode<synchronous>, transform_indices = @transform_7, window_bounds = array<i64: 32, 32>}, {pipeline_mode = #tpu.pipeline_mode<synchronous>, transform_indices = @transform_8, window_bounds = array<i64: 32, 32>}, {pipeline_mode = #tpu.pipeline_mode<synchronous>, transform_indices = @transform_9, window_bounds = array<i64: 1, 32>}, {pipeline_mode = #tpu.pipeline_mode<synchronous>, transform_indices = @transform_10, window_bounds = array<i64: 32, 128>}, {pipeline_mode = #tpu.pipeline_mode<synchronous>, transform_indices = @transform_11, window_bounds = array<i64: 1, 128>}, {pipeline_mode = #tpu.pipeline_mode<synchronous>, transform_indices = @transform_12, window_bounds = array<i64: 128, 32>}, {pipeline_mode = #tpu.pipeline_mode<synchronous>, transform_indices = @transform_13, window_bounds = array<i64: 1, 32>}, {transform_indices = @transform_14, window_bounds = array<i64: 1, 8, 32>}]} {
    %c8_i32 = arith.constant 8 : i32
    %0 = arith.muli %arg1, %c8_i32 : i32
    %1 = tpu.assume_multiple %0, 8 : i32
    %c0 = arith.constant 0 : index
    %2 = arith.index_cast %1 : i32 to index
    %c0_0 = arith.constant 0 : index
    %3 = vector.load %arg2[%c0, %2, %c0_0] : memref<1x8x32xf32, #tpu.memory_space<vmem>>, vector<1x8x32xf32>
    %4 = vector.shape_cast %3 : vector<1x8x32xf32> to vector<8x32xf32>
    %c0_1 = arith.constant 0 : index
    %c0_2 = arith.constant 0 : index
    %c0_3 = arith.constant 0 : index
    %5 = vector.load %arg2[%c0_1, %c0_2, %c0_3] : memref<1x8x32xf32, #tpu.memory_space<vmem>>, vector<1x8x32xf32>
    %6 = vector.shape_cast %5 : vector<1x8x32xf32> to vector<8x32xf32>
    %c0_4 = arith.constant 0 : index
    %c0_5 = arith.constant 0 : index
    %7 = vector.load %arg3[%c0_4, %c0_5] : memref<1x32xf32, #tpu.memory_space<vmem>>, vector<1x32xf32>
    %c0_6 = arith.constant 0 : index
    %c0_7 = arith.constant 0 : index
    %8 = vector.load %arg4[%c0_6, %c0_7] : memref<1x32xf32, #tpu.memory_space<vmem>>, vector<1x32xf32>
    %cst = arith.constant dense<0.000000e+00> : vector<8xf32>
    %9 = vector.multi_reduction <add>, %4, %cst [1] : vector<8x32xf32> to vector<8xf32>
    %10 = vector.shape_cast %9 : vector<8xf32> to vector<8x1xf32>
    %cst_8 = arith.constant 3.200000e+01 : f32
    %11 = vector.broadcast %cst_8 : f32 to vector<8x1xf32>
    %12 = arith.divf %10, %11 : vector<8x1xf32>
    %13 = arith.mulf %4, %4 : vector<8x32xf32>
    %cst_9 = arith.constant dense<0.000000e+00> : vector<8xf32>
    %14 = vector.multi_reduction <add>, %13, %cst_9 [1] : vector<8x32xf32> to vector<8xf32>
    %15 = vector.shape_cast %14 : vector<8xf32> to vector<8x1xf32>
    %cst_10 = arith.constant 3.200000e+01 : f32
    %16 = vector.broadcast %cst_10 : f32 to vector<8x1xf32>
    %17 = arith.divf %15, %16 : vector<8x1xf32>
    %18 = arith.mulf %12, %12 : vector<8x1xf32>
    %19 = arith.subf %17, %18 : vector<8x1xf32>
    %20 = vector.broadcast %12 : vector<8x1xf32> to vector<8x32xf32>
    %21 = arith.subf %4, %20 : vector<8x32xf32>
    %cst_11 = arith.constant 9.99999974E-6 : f32
    %22 = vector.broadcast %cst_11 : f32 to vector<8x1xf32>
    %23 = arith.addf %19, %22 : vector<8x1xf32>
    %24 = math.rsqrt %23 : vector<8x1xf32>
    %25 = vector.broadcast %24 : vector<8x1xf32> to vector<8x32xf32>
    %26 = arith.mulf %21, %25 : vector<8x32xf32>
    %27 = vector.broadcast %7 : vector<1x32xf32> to vector<8x32xf32>
    %28 = arith.mulf %26, %27 : vector<8x32xf32>
    %29 = vector.broadcast %8 : vector<1x32xf32> to vector<8x32xf32>
    %30 = arith.addf %28, %29 : vector<8x32xf32>
    %cst_12 = arith.constant dense<0.000000e+00> : vector<8xf32>
    %31 = vector.multi_reduction <add>, %6, %cst_12 [1] : vector<8x32xf32> to vector<8xf32>
    %32 = vector.shape_cast %31 : vector<8xf32> to vector<8x1xf32>
    %cst_13 = arith.constant 3.200000e+01 : f32
    %33 = vector.broadcast %cst_13 : f32 to vector<8x1xf32>
    %34 = arith.divf %32, %33 : vector<8x1xf32>
    %35 = arith.mulf %6, %6 : vector<8x32xf32>
    %cst_14 = arith.constant dense<0.000000e+00> : vector<8xf32>
    %36 = vector.multi_reduction <add>, %35, %cst_14 [1] : vector<8x32xf32> to vector<8xf32>
    %37 = vector.shape_cast %36 : vector<8xf32> to vector<8x1xf32>
    %cst_15 = arith.constant 3.200000e+01 : f32
    %38 = vector.broadcast %cst_15 : f32 to vector<8x1xf32>
    %39 = arith.divf %37, %38 : vector<8x1xf32>
    %40 = arith.mulf %34, %34 : vector<8x1xf32>
    %41 = arith.subf %39, %40 : vector<8x1xf32>
    %42 = vector.broadcast %34 : vector<8x1xf32> to vector<8x32xf32>
    %43 = arith.subf %6, %42 : vector<8x32xf32>
    %cst_16 = arith.constant 9.99999974E-6 : f32
    %44 = vector.broadcast %cst_16 : f32 to vector<8x1xf32>
    %45 = arith.addf %41, %44 : vector<8x1xf32>
    %46 = math.rsqrt %45 : vector<8x1xf32>
    %47 = vector.broadcast %46 : vector<8x1xf32> to vector<8x32xf32>
    %48 = arith.mulf %43, %47 : vector<8x32xf32>
    %49 = vector.broadcast %7 : vector<1x32xf32> to vector<8x32xf32>
    %50 = arith.mulf %48, %49 : vector<8x32xf32>
    %51 = vector.broadcast %8 : vector<1x32xf32> to vector<8x32xf32>
    %52 = arith.addf %50, %51 : vector<8x32xf32>
    %53 = arith.truncf %30 : vector<8x32xf32> to vector<8x32xbf16>
    %54 = arith.truncf %52 : vector<8x32xf32> to vector<8x32xbf16>
    %c0_17 = arith.constant 0 : index
    %c0_18 = arith.constant 0 : index
    %55 = vector.load %arg7[%c0_17, %c0_18] : memref<32x32xbf16, #tpu.memory_space<vmem>>, vector<32x32xbf16>
    %cst_19 = arith.constant dense<0.000000e+00> : vector<8x32xf32>
    %56 = tpu.matmul %53, %55, %cst_19 {dimension_numbers = #tpu.dot_dimension_numbers<[1], [0], [0], [1], [0, 0, 1, 1], [], []>} : vector<8x32xbf16>, vector<32x32xbf16>, vector<8x32xf32> -> vector<8x32xf32>
    %c0_20 = arith.constant 0 : index
    %c0_21 = arith.constant 0 : index
    %57 = vector.load %arg8[%c0_20, %c0_21] : memref<32x32xbf16, #tpu.memory_space<vmem>>, vector<32x32xbf16>
    %cst_22 = arith.constant dense<0.000000e+00> : vector<8x32xf32>
    %58 = tpu.matmul %54, %57, %cst_22 {dimension_numbers = #tpu.dot_dimension_numbers<[1], [0], [0], [1], [0, 0, 1, 1], [], []>} : vector<8x32xbf16>, vector<32x32xbf16>, vector<8x32xf32> -> vector<8x32xf32>
    %c0_23 = arith.constant 0 : index
    %c0_24 = arith.constant 0 : index
    %59 = vector.load %arg9[%c0_23, %c0_24] : memref<32x32xbf16, #tpu.memory_space<vmem>>, vector<32x32xbf16>
    %cst_25 = arith.constant dense<0.000000e+00> : vector<8x32xf32>
    %60 = tpu.matmul %54, %59, %cst_25 {dimension_numbers = #tpu.dot_dimension_numbers<[1], [0], [0], [1], [0, 0, 1, 1], [], []>} : vector<8x32xbf16>, vector<32x32xbf16>, vector<8x32xf32> -> vector<8x32xf32>
    %61 = tpu.iota {dimensions = array<i32: 0>} : vector<8x8xi32>
    %62 = vector.broadcast %1 : i32 to vector<8x8xi32>
    %63 = arith.addi %61, %62 : vector<8x8xi32>
    %64 = tpu.iota {dimensions = array<i32: 1>} : vector<8x8xi32>
    %65 = arith.cmpi sle, %64, %63 : vector<8x8xi32>
    %cst_26 = arith.constant 0.353553385 : f32
    %66 = vector.broadcast %cst_26 : f32 to vector<8x32xf32>
    %67 = arith.mulf %56, %66 : vector<8x32xf32>
    %68 = arith.truncf %67 : vector<8x32xf32> to vector<8x32xbf16>
    %69 = arith.truncf %58 : vector<8x32xf32> to vector<8x32xbf16>
    %70 = arith.truncf %60 : vector<8x32xf32> to vector<8x32xbf16>
    %71 = vector.extract_strided_slice %68 {offsets = [0, 0], sizes = [8, 8], strides = [1, 1]} : vector<8x32xbf16> to vector<8x8xbf16>
    %72 = vector.extract_strided_slice %69 {offsets = [0, 0], sizes = [8, 8], strides = [1, 1]} : vector<8x32xbf16> to vector<8x8xbf16>
    %cst_27 = arith.constant dense<0.000000e+00> : vector<8x8xf32>
    %73 = tpu.matmul %71, %72, %cst_27 {dimension_numbers = #tpu.dot_dimension_numbers<[1], [1], [0], [0], [0, 0, 1, 0], [], []>} : vector<8x8xbf16>, vector<8x8xbf16>, vector<8x8xf32> -> vector<8x8xf32>
    %cst_28 = arith.constant 0xFF800000 : f32
    %74 = vector.broadcast %cst_28 : f32 to vector<8x8xf32>
    %75 = arith.select %65, %73, %74 : vector<8x8xi1>, vector<8x8xf32>
    %cst_29 = arith.constant dense<0xFF800000> : vector<8xf32>
    %76 = vector.multi_reduction <maximumf>, %75, %cst_29 [1] : vector<8x8xf32> to vector<8xf32>
    %77 = vector.shape_cast %76 : vector<8xf32> to vector<8x1xf32>
    %78 = vector.broadcast %77 : vector<8x1xf32> to vector<8x8xf32>
    %79 = arith.subf %75, %78 : vector<8x8xf32>
    %80 = math.exp %79 : vector<8x8xf32>
    %cst_30 = arith.constant dense<0.000000e+00> : vector<8xf32>
    %81 = vector.multi_reduction <add>, %80, %cst_30 [1] : vector<8x8xf32> to vector<8xf32>
    %82 = vector.shape_cast %81 : vector<8xf32> to vector<8x1xf32>
    %83 = arith.truncf %80 : vector<8x8xf32> to vector<8x8xbf16>
    %84 = vector.extract_strided_slice %70 {offsets = [0, 0], sizes = [8, 8], strides = [1, 1]} : vector<8x32xbf16> to vector<8x8xbf16>
    %cst_31 = arith.constant dense<0.000000e+00> : vector<8x8xf32>
    %85 = tpu.matmul %83, %84, %cst_31 {dimension_numbers = #tpu.dot_dimension_numbers<[1], [0], [0], [1], [0, 0, 1, 1], [], []>} : vector<8x8xbf16>, vector<8x8xbf16>, vector<8x8xf32> -> vector<8x8xf32>
    %86 = tpu.reciprocal %82 {approx = true} : vector<8x1xf32> -> vector<8x1xf32>
    %87 = vector.broadcast %86 : vector<8x1xf32> to vector<8x8xf32>
    %88 = arith.mulf %85, %87 : vector<8x8xf32>
    %89 = vector.extract_strided_slice %68 {offsets = [0, 8], sizes = [8, 8], strides = [1, 1]} : vector<8x32xbf16> to vector<8x8xbf16>
    %90 = vector.extract_strided_slice %69 {offsets = [0, 8], sizes = [8, 8], strides = [1, 1]} : vector<8x32xbf16> to vector<8x8xbf16>
    %cst_32 = arith.constant dense<0.000000e+00> : vector<8x8xf32>
    %91 = tpu.matmul %89, %90, %cst_32 {dimension_numbers = #tpu.dot_dimension_numbers<[1], [1], [0], [0], [0, 0, 1, 0], [], []>} : vector<8x8xbf16>, vector<8x8xbf16>, vector<8x8xf32> -> vector<8x8xf32>
    %cst_33 = arith.constant 0xFF800000 : f32
    %92 = vector.broadcast %cst_33 : f32 to vector<8x8xf32>
    %93 = arith.select %65, %91, %92 : vector<8x8xi1>, vector<8x8xf32>
    %cst_34 = arith.constant dense<0xFF800000> : vector<8xf32>
    %94 = vector.multi_reduction <maximumf>, %93, %cst_34 [1] : vector<8x8xf32> to vector<8xf32>
    %95 = vector.shape_cast %94 : vector<8xf32> to vector<8x1xf32>
    %96 = vector.broadcast %95 : vector<8x1xf32> to vector<8x8xf32>
    %97 = arith.subf %93, %96 : vector<8x8xf32>
    %98 = math.exp %97 : vector<8x8xf32>
    %cst_35 = arith.constant dense<0.000000e+00> : vector<8xf32>
    %99 = vector.multi_reduction <add>, %98, %cst_35 [1] : vector<8x8xf32> to vector<8xf32>
    %100 = vector.shape_cast %99 : vector<8xf32> to vector<8x1xf32>
    %101 = arith.truncf %98 : vector<8x8xf32> to vector<8x8xbf16>
    %102 = vector.extract_strided_slice %70 {offsets = [0, 8], sizes = [8, 8], strides = [1, 1]} : vector<8x32xbf16> to vector<8x8xbf16>
    %cst_36 = arith.constant dense<0.000000e+00> : vector<8x8xf32>
    %103 = tpu.matmul %101, %102, %cst_36 {dimension_numbers = #tpu.dot_dimension_numbers<[1], [0], [0], [1], [0, 0, 1, 1], [], []>} : vector<8x8xbf16>, vector<8x8xbf16>, vector<8x8xf32> -> vector<8x8xf32>
    %104 = tpu.reciprocal %100 {approx = true} : vector<8x1xf32> -> vector<8x1xf32>
    %105 = vector.broadcast %104 : vector<8x1xf32> to vector<8x8xf32>
    %106 = arith.mulf %103, %105 : vector<8x8xf32>
    %107 = vector.extract_strided_slice %68 {offsets = [0, 16], sizes = [8, 8], strides = [1, 1]} : vector<8x32xbf16> to vector<8x8xbf16>
    %108 = vector.extract_strided_slice %69 {offsets = [0, 16], sizes = [8, 8], strides = [1, 1]} : vector<8x32xbf16> to vector<8x8xbf16>
    %cst_37 = arith.constant dense<0.000000e+00> : vector<8x8xf32>
    %109 = tpu.matmul %107, %108, %cst_37 {dimension_numbers = #tpu.dot_dimension_numbers<[1], [1], [0], [0], [0, 0, 1, 0], [], []>} : vector<8x8xbf16>, vector<8x8xbf16>, vector<8x8xf32> -> vector<8x8xf32>
    %cst_38 = arith.constant 0xFF800000 : f32
    %110 = vector.broadcast %cst_38 : f32 to vector<8x8xf32>
    %111 = arith.select %65, %109, %110 : vector<8x8xi1>, vector<8x8xf32>
    %cst_39 = arith.constant dense<0xFF800000> : vector<8xf32>
    %112 = vector.multi_reduction <maximumf>, %111, %cst_39 [1] : vector<8x8xf32> to vector<8xf32>
    %113 = vector.shape_cast %112 : vector<8xf32> to vector<8x1xf32>
    %114 = vector.broadcast %113 : vector<8x1xf32> to vector<8x8xf32>
    %115 = arith.subf %111, %114 : vector<8x8xf32>
    %116 = math.exp %115 : vector<8x8xf32>
    %cst_40 = arith.constant dense<0.000000e+00> : vector<8xf32>
    %117 = vector.multi_reduction <add>, %116, %cst_40 [1] : vector<8x8xf32> to vector<8xf32>
    %118 = vector.shape_cast %117 : vector<8xf32> to vector<8x1xf32>
    %119 = arith.truncf %116 : vector<8x8xf32> to vector<8x8xbf16>
    %120 = vector.extract_strided_slice %70 {offsets = [0, 16], sizes = [8, 8], strides = [1, 1]} : vector<8x32xbf16> to vector<8x8xbf16>
    %cst_41 = arith.constant dense<0.000000e+00> : vector<8x8xf32>
    %121 = tpu.matmul %119, %120, %cst_41 {dimension_numbers = #tpu.dot_dimension_numbers<[1], [0], [0], [1], [0, 0, 1, 1], [], []>} : vector<8x8xbf16>, vector<8x8xbf16>, vector<8x8xf32> -> vector<8x8xf32>
    %122 = tpu.reciprocal %118 {approx = true} : vector<8x1xf32> -> vector<8x1xf32>
    %123 = vector.broadcast %122 : vector<8x1xf32> to vector<8x8xf32>
    %124 = arith.mulf %121, %123 : vector<8x8xf32>
    %125 = vector.extract_strided_slice %68 {offsets = [0, 24], sizes = [8, 8], strides = [1, 1]} : vector<8x32xbf16> to vector<8x8xbf16>
    %126 = vector.extract_strided_slice %69 {offsets = [0, 24], sizes = [8, 8], strides = [1, 1]} : vector<8x32xbf16> to vector<8x8xbf16>
    %cst_42 = arith.constant dense<0.000000e+00> : vector<8x8xf32>
    %127 = tpu.matmul %125, %126, %cst_42 {dimension_numbers = #tpu.dot_dimension_numbers<[1], [1], [0], [0], [0, 0, 1, 0], [], []>} : vector<8x8xbf16>, vector<8x8xbf16>, vector<8x8xf32> -> vector<8x8xf32>
    %cst_43 = arith.constant 0xFF800000 : f32
    %128 = vector.broadcast %cst_43 : f32 to vector<8x8xf32>
    %129 = arith.select %65, %127, %128 : vector<8x8xi1>, vector<8x8xf32>
    %cst_44 = arith.constant dense<0xFF800000> : vector<8xf32>
    %130 = vector.multi_reduction <maximumf>, %129, %cst_44 [1] : vector<8x8xf32> to vector<8xf32>
    %131 = vector.shape_cast %130 : vector<8xf32> to vector<8x1xf32>
    %132 = vector.broadcast %131 : vector<8x1xf32> to vector<8x8xf32>
    %133 = arith.subf %129, %132 : vector<8x8xf32>
    %134 = math.exp %133 : vector<8x8xf32>
    %cst_45 = arith.constant dense<0.000000e+00> : vector<8xf32>
    %135 = vector.multi_reduction <add>, %134, %cst_45 [1] : vector<8x8xf32> to vector<8xf32>
    %136 = vector.shape_cast %135 : vector<8xf32> to vector<8x1xf32>
    %137 = arith.truncf %134 : vector<8x8xf32> to vector<8x8xbf16>
    %138 = vector.extract_strided_slice %70 {offsets = [0, 24], sizes = [8, 8], strides = [1, 1]} : vector<8x32xbf16> to vector<8x8xbf16>
    %cst_46 = arith.constant dense<0.000000e+00> : vector<8x8xf32>
    %139 = tpu.matmul %137, %138, %cst_46 {dimension_numbers = #tpu.dot_dimension_numbers<[1], [0], [0], [1], [0, 0, 1, 1], [], []>} : vector<8x8xbf16>, vector<8x8xbf16>, vector<8x8xf32> -> vector<8x8xf32>
    %140 = tpu.reciprocal %136 {approx = true} : vector<8x1xf32> -> vector<8x1xf32>
    %141 = vector.broadcast %140 : vector<8x1xf32> to vector<8x8xf32>
    %142 = arith.mulf %139, %141 : vector<8x8xf32>
    %143 = tpu.concatenate %88, %106, %124, %142 in 1 : vector<8x8xf32>, vector<8x8xf32>, vector<8x8xf32>, vector<8x8xf32> -> vector<8x32xf32>
    %144 = arith.truncf %143 : vector<8x32xf32> to vector<8x32xbf16>
    %c0_47 = arith.constant 0 : index
    %c0_48 = arith.constant 0 : index
    %145 = vector.load %arg10[%c0_47, %c0_48] : memref<32x32xbf16, #tpu.memory_space<vmem>>, vector<32x32xbf16>
    %cst_49 = arith.constant dense<0.000000e+00> : vector<8x32xf32>
    %146 = tpu.matmul %144, %145, %cst_49 {dimension_numbers = #tpu.dot_dimension_numbers<[1], [0], [0], [1], [0, 0, 1, 1], [], []>} : vector<8x32xbf16>, vector<32x32xbf16>, vector<8x32xf32> -> vector<8x32xf32>
    %c0_50 = arith.constant 0 : index
    %c0_51 = arith.constant 0 : index
    %147 = vector.load %arg11[%c0_50, %c0_51] : memref<1x32xf32, #tpu.memory_space<vmem>>, vector<1x32xf32>
    %148 = vector.broadcast %147 : vector<1x32xf32> to vector<8x32xf32>
    %149 = arith.addf %146, %148 : vector<8x32xf32>
    %150 = arith.addf %4, %149 : vector<8x32xf32>
    %c0_52 = arith.constant 0 : index
    %c0_53 = arith.constant 0 : index
    %151 = vector.load %arg5[%c0_52, %c0_53] : memref<1x32xf32, #tpu.memory_space<vmem>>, vector<1x32xf32>
    %c0_54 = arith.constant 0 : index
    %c0_55 = arith.constant 0 : index
    %152 = vector.load %arg6[%c0_54, %c0_55] : memref<1x32xf32, #tpu.memory_space<vmem>>, vector<1x32xf32>
    %cst_56 = arith.constant dense<0.000000e+00> : vector<8xf32>
    %153 = vector.multi_reduction <add>, %150, %cst_56 [1] : vector<8x32xf32> to vector<8xf32>
    %154 = vector.shape_cast %153 : vector<8xf32> to vector<8x1xf32>
    %cst_57 = arith.constant 3.200000e+01 : f32
    %155 = vector.broadcast %cst_57 : f32 to vector<8x1xf32>
    %156 = arith.divf %154, %155 : vector<8x1xf32>
    %157 = arith.mulf %150, %150 : vector<8x32xf32>
    %cst_58 = arith.constant dense<0.000000e+00> : vector<8xf32>
    %158 = vector.multi_reduction <add>, %157, %cst_58 [1] : vector<8x32xf32> to vector<8xf32>
    %159 = vector.shape_cast %158 : vector<8xf32> to vector<8x1xf32>
    %cst_59 = arith.constant 3.200000e+01 : f32
    %160 = vector.broadcast %cst_59 : f32 to vector<8x1xf32>
    %161 = arith.divf %159, %160 : vector<8x1xf32>
    %162 = arith.mulf %156, %156 : vector<8x1xf32>
    %163 = arith.subf %161, %162 : vector<8x1xf32>
    %164 = vector.broadcast %156 : vector<8x1xf32> to vector<8x32xf32>
    %165 = arith.subf %150, %164 : vector<8x32xf32>
    %cst_60 = arith.constant 9.99999974E-6 : f32
    %166 = vector.broadcast %cst_60 : f32 to vector<8x1xf32>
    %167 = arith.addf %163, %166 : vector<8x1xf32>
    %168 = math.rsqrt %167 : vector<8x1xf32>
    %169 = vector.broadcast %168 : vector<8x1xf32> to vector<8x32xf32>
    %170 = arith.mulf %165, %169 : vector<8x32xf32>
    %171 = vector.broadcast %151 : vector<1x32xf32> to vector<8x32xf32>
    %172 = arith.mulf %170, %171 : vector<8x32xf32>
    %173 = vector.broadcast %152 : vector<1x32xf32> to vector<8x32xf32>
    %174 = arith.addf %172, %173 : vector<8x32xf32>
    %175 = arith.truncf %174 : vector<8x32xf32> to vector<8x32xbf16>
    %cst_61 = arith.constant 0.000000e+00 : f32
    %176 = vector.broadcast %cst_61 : f32 to vector<8x32xf32>
    %c0_62 = arith.constant 0 : index
    %c0_63 = arith.constant 0 : index
    %177 = vector.load %arg12[%c0_62, %c0_63] : memref<32x128xbf16, #tpu.memory_space<vmem>>, vector<32x128xbf16>
    %c0_64 = arith.constant 0 : index
    %c0_65 = arith.constant 0 : index
    %178 = vector.load %arg13[%c0_64, %c0_65] : memref<1x128xf32, #tpu.memory_space<vmem>>, vector<1x128xf32>
    %cst_66 = arith.constant dense<0.000000e+00> : vector<8x128xf32>
    %179 = tpu.matmul %175, %177, %cst_66 {dimension_numbers = #tpu.dot_dimension_numbers<[1], [0], [0], [1], [0, 0, 1, 1], [], []>} : vector<8x32xbf16>, vector<32x128xbf16>, vector<8x128xf32> -> vector<8x128xf32>
    %180 = vector.broadcast %178 : vector<1x128xf32> to vector<8x128xf32>
    %181 = arith.addf %179, %180 : vector<8x128xf32>
    %cst_67 = arith.constant 0.000000e+00 : f32
    %182 = vector.broadcast %cst_67 : f32 to vector<8x128xf32>
    %183 = arith.maximumf %181, %182 : vector<8x128xf32>
    %184 = arith.truncf %183 : vector<8x128xf32> to vector<8x128xbf16>
    %c0_68 = arith.constant 0 : index
    %c0_69 = arith.constant 0 : index
    %185 = vector.load %arg14[%c0_68, %c0_69] : memref<128x32xbf16, #tpu.memory_space<vmem>>, vector<128x32xbf16>
    %cst_70 = arith.constant dense<0.000000e+00> : vector<8x32xf32>
    %186 = tpu.matmul %184, %185, %cst_70 {dimension_numbers = #tpu.dot_dimension_numbers<[1], [0], [0], [1], [0, 0, 1, 1], [], []>} : vector<8x128xbf16>, vector<128x32xbf16>, vector<8x32xf32> -> vector<8x32xf32>
    %187 = arith.addf %176, %186 : vector<8x32xf32>
    %188 = arith.addf %150, %187 : vector<8x32xf32>
    %c0_71 = arith.constant 0 : index
    %c0_72 = arith.constant 0 : index
    %189 = vector.load %arg15[%c0_71, %c0_72] : memref<1x32xf32, #tpu.memory_space<vmem>>, vector<1x32xf32>
    %190 = vector.broadcast %189 : vector<1x32xf32> to vector<8x32xf32>
    %191 = arith.addf %188, %190 : vector<8x32xf32>
    %c0_73 = arith.constant 0 : index
    %c0_74 = arith.constant 0 : index
    %c0_75 = arith.constant 0 : index
    %192 = vector.load %arg16[%c0_73, %c0_74, %c0_75] : memref<1x8x32xf32, #tpu.memory_space<vmem>>, vector<1x8x32xf32>
    %193 = vector.shape_cast %192 : vector<1x8x32xf32> to vector<8x32xf32>
    %194 = vector.shape_cast %191 : vector<8x32xf32> to vector<1x8x32xf32>
    tpu.vector_store %arg16[%c0_73, %c0_74, %c0_75], %194 {strides = array<i32>} : memref<1x8x32xf32, #tpu.memory_space<vmem>>, vector<1x8x32xf32>,
    return
  }
  func.func @transform_0(%arg0: i32, %arg1: i32) -> (i32, i32, i32) {
    %c0_i32 = arith.constant 0 : i32
    %c0_i32_0 = arith.constant 0 : i32
    %c0_i32_1 = arith.constant 0 : i32
    return %arg0, %c0_i32, %c0_i32_0 : i32, i32, i32
  }
  func.func @transform_1(%arg0: i32, %arg1: i32) -> (i32, i32) {
    %c0_i32 = arith.constant 0 : i32
    %c0_i32_0 = arith.constant 0 : i32
    %c0_i32_1 = arith.constant 0 : i32
    return %c0_i32, %c0_i32_0 : i32, i32
  }
  func.func @transform_2(%arg0: i32, %arg1: i32) -> (i32, i32) {
    %c0_i32 = arith.constant 0 : i32
    %c0_i32_0 = arith.constant 0 : i32
    %c0_i32_1 = arith.constant 0 : i32
    return %c0_i32, %c0_i32_0 : i32, i32
  }
  func.func @transform_3(%arg0: i32, %arg1: i32) -> (i32, i32) {
    %c0_i32 = arith.constant 0 : i32
    %c0_i32_0 = arith.constant 0 : i32
    %c0_i32_1 = arith.constant 0 : i32
    return %c0_i32, %c0_i32_0 : i32, i32
  }
  func.func @transform_4(%arg0: i32, %arg1: i32) -> (i32, i32) {
    %c0_i32 = arith.constant 0 : i32
    %c0_i32_0 = arith.constant 0 : i32
    %c0_i32_1 = arith.constant 0 : i32
    return %c0_i32, %c0_i32_0 : i32, i32
  }
  func.func @transform_5(%arg0: i32, %arg1: i32) -> (i32, i32) {
    %c0_i32 = arith.constant 0 : i32
    %c0_i32_0 = arith.constant 0 : i32
    %c0_i32_1 = arith.constant 0 : i32
    return %c0_i32, %c0_i32_0 : i32, i32
  }
  func.func @transform_6(%arg0: i32, %arg1: i32) -> (i32, i32) {
    %c0_i32 = arith.constant 0 : i32
    %c0_i32_0 = arith.constant 0 : i32
    %c0_i32_1 = arith.constant 0 : i32
    return %c0_i32, %c0_i32_0 : i32, i32
  }
  func.func @transform_7(%arg0: i32, %arg1: i32) -> (i32, i32) {
    %c0_i32 = arith.constant 0 : i32
    %c0_i32_0 = arith.constant 0 : i32
    %c0_i32_1 = arith.constant 0 : i32
    return %c0_i32, %c0_i32_0 : i32, i32
  }
  func.func @transform_8(%arg0: i32, %arg1: i32) -> (i32, i32) {
    %c0_i32 = arith.constant 0 : i32
    %c0_i32_0 = arith.constant 0 : i32
    %c0_i32_1 = arith.constant 0 : i32
    return %c0_i32, %c0_i32_0 : i32, i32
  }
  func.func @transform_9(%arg0: i32, %arg1: i32) -> (i32, i32) {
    %c0_i32 = arith.constant 0 : i32
    %c0_i32_0 = arith.constant 0 : i32
    %c0_i32_1 = arith.constant 0 : i32
    return %c0_i32, %c0_i32_0 : i32, i32
  }
  func.func @transform_10(%arg0: i32, %arg1: i32) -> (i32, i32) {
    %c0_i32 = arith.constant 0 : i32
    %c0_i32_0 = arith.constant 0 : i32
    %c0_i32_1 = arith.constant 0 : i32
    return %c0_i32, %c0_i32_0 : i32, i32
  }
  func.func @transform_11(%arg0: i32, %arg1: i32) -> (i32, i32) {
    %c0_i32 = arith.constant 0 : i32
    %c0_i32_0 = arith.constant 0 : i32
    %c0_i32_1 = arith.constant 0 : i32
    return %c0_i32, %c0_i32_0 : i32, i32
  }
  func.func @transform_12(%arg0: i32, %arg1: i32) -> (i32, i32) {
    %c0_i32 = arith.constant 0 : i32
    %c0_i32_0 = arith.constant 0 : i32
    %c0_i32_1 = arith.constant 0 : i32
    return %c0_i32, %c0_i32_0 : i32, i32
  }
  func.func @transform_13(%arg0: i32, %arg1: i32) -> (i32, i32) {
    %c0_i32 = arith.constant 0 : i32
    %c0_i32_0 = arith.constant 0 : i32
    %c0_i32_1 = arith.constant 0 : i32
    return %c0_i32, %c0_i32_0 : i32, i32
  }
  func.func @transform_14(%arg0: i32, %arg1: i32) -> (i32, i32, i32) {
    %c0_i32 = arith.constant 0 : i32
    %c0_i32_0 = arith.constant 0 : i32
    return %arg0, %arg1, %c0_i32 : i32, i32, i32
  }
}

</mosaic_0001>

<llo_original>
// kernel: tpu_custom_call.1
$region0: #{tpu_custom_call.1}
  #allocation0 [shape = 'u32[]', space=smem, size = 0x4, offset = 0x4, fixed_abs, tag = 'smem constant byte address 0x4 - core index']
  #allocation1 [shape = 'u32[144,128]{1,0:T(1,128)}', space=vmem, size = 0x12000, scoped, tag = 'internal scratch']
  %s0 = inlined_call_operand.vmem [shape: f32[2,8,32], index: 0, kind: input, shape index: {}]
  %s1 = inlined_call_operand.vmem [shape: f32[1,32], index: 1, kind: input, shape index: {}]
  %s2 = inlined_call_operand.vmem [shape: f32[1,32], index: 2, kind: input, shape index: {}]
  %s3 = inlined_call_operand.vmem [shape: f32[1,32], index: 3, kind: input, shape index: {}]
  %s4 = inlined_call_operand.vmem [shape: f32[1,32], index: 4, kind: input, shape index: {}]
  %s5 = inlined_call_operand.vmem [shape: bf16[32,32], index: 5, kind: input, shape index: {}]
  %s6 = inlined_call_operand.vmem [shape: bf16[32,32], index: 6, kind: input, shape index: {}]
  %s7 = inlined_call_operand.vmem [shape: bf16[32,32], index: 7, kind: input, shape index: {}]
  %s8 = inlined_call_operand.vmem [shape: bf16[32,32], index: 8, kind: input, shape index: {}]
  %s9 = inlined_call_operand.vmem [shape: f32[1,32], index: 9, kind: input, shape index: {}]
  %s10 = inlined_call_operand.hbm [shape: bf16[32,128], index: 10, kind: input, shape index: {}]
  %s11 = inlined_call_operand.hbm [shape: f32[1,128], index: 11, kind: input, shape index: {}]
  %s12 = inlined_call_operand.vmem [shape: bf16[128,32], index: 12, kind: input, shape index: {}]
  %s13 = inlined_call_operand.vmem [shape: f32[1,32], index: 13, kind: input, shape index: {}]
  %s14 = inlined_call_operand.hbm [shape: f32[2,8,32], index: 14, kind: output, shape index: {}]
  %s15 = sld [smem:[#allocation0]]
  $region97: #{tpu_custom_call.1} parent=0
    _
  %s17 = ssub.s32 1, %s15
  %s18 = scalar_select 0, %s17, %s15
  $region1: #{tpu_custom_call.1} parent=0
    #allocation2 [shape = 'u8[8192]{0}', space=vmem, size = 0x2000, scoped, tag = 'input window, operand 10, single buffered']
    #allocation3 [shape = 's32[2]{0}', space=sflag, size = 0x8, scoped, tag = 'scoped memory for tpu_custom_call.1']
    #allocation4 [shape = 's32[2]{0}', space=sflag, size = 0x8, scoped, tag = 'scoped memory for tpu_custom_call.1']
    #allocation5 [shape = 'u8[512]{0}', space=vmem, size = 0x400, scoped, tag = 'input window, operand 11, single buffered']
    #allocation6 [shape = 's32[1]{0}', space=sflag, size = 0x4, scoped, tag = 'scoped memory for tpu_custom_call.1']
    #allocation7 [shape = 'u8[8192]{0}', space=vmem, size = 0x2000, scoped, tag = 'output window, operand 0']
    %19 = vsyncpa [#allocation3], 0
    %20 = vsyncpa [#allocation6], 0
    %21 = vsyncpa [#allocation4], 0
    %s22 = scalar_lea.sflag [#allocation4], 1
    %23 = vsyncpa %s22, 0
    loop: start=0, step=1, limit=4
    $region2: #{tpu_custom_call.1} parent=1 // loop_pre_header
      _
    $region3: #{tpu_custom_call.1} parent=1 // loop_header
      %s25 = sphi 0, %s29
      %p26 = scmp.ge.s32.totalorder %s25, 4
      %s32 = sphi 0, %s44
      %s33 = sphi 0, %s40
      %s34 = sphi 0, %s32
      %s35 = sphi 0, %s33
      %s36 = sphi 0, %s34
      %s37 = sphi 0, %s35
      %s47 = sphi 0, %s49
      %s50 = sphi 0, %s47
      %s51 = sphi 0, %s50
      %s67 = sphi 0, %s51
      %s71 = sphi 0, %s71
      %s73 = sphi 0, %s71
      %s74 = sphi 0, %s73
      %s88 = sphi 0, %s74
      %s92 = sphi 0, %s92
      %s94 = sphi 0, %s92
      %s95 = sphi 0, %s94
      %s109 = sphi 0, %s95
      %s113 = sphi 0, %s113
      %s115 = sphi 0, %s113
      %s116 = sphi 0, %s115
      %s130 = sphi 0, %s116
      %s134 = sphi 0, %s134
      %s136 = sphi 0, %s134
      %s137 = sphi 0, %s136
      %s151 = sphi 0, %s137
      %s155 = sphi 0, %s155
      %s157 = sphi 0, %s155
      %s158 = sphi 0, %s157
      %s172 = sphi 0, %s158
      %s176 = sphi 0, %s176
      %s178 = sphi 0, %s176
      %s179 = sphi 0, %s178
      %s193 = sphi 0, %s179
      %s197 = sphi 0, %s197
      %s199 = sphi 0, %s197
      %s200 = sphi 0, %s199
      %s214 = sphi 0, %s200
      %s218 = sphi 0, %s218
      %s220 = sphi 0, %s218
      %s221 = sphi 0, %s220
      %s235 = sphi 0, %s221
      %s239 = sphi 0, %s239
      %s241 = sphi 0, %s239
      %s242 = sphi 0, %s241
      %s256 = sphi 0, %s242
      %s260 = sphi 0, %s260
      %s262 = sphi 0, %s260
      %s263 = sphi 0, %s262
      %s277 = sphi 0, %s263
      %s281 = sphi 0, %s281
      %s283 = sphi 0, %s281
      %s284 = sphi 0, %s283
      %s298 = sphi 0, %s284
      %s302 = sphi 0, %s302
      %s304 = sphi 0, %s302
      %s305 = sphi 0, %s304
      %s319 = sphi 0, %s305
      %s323 = sphi 0, %s323
      %s325 = sphi 0, %s323
      %s326 = sphi 0, %s325
      %s340 = sphi 0, %s326
      %s348 = sphi 0, %s350
      %s351 = sphi 0, %s348
      %s352 = sphi 0, %s351
      %s368 = sphi 0, %s352
    $region4: #{tpu_custom_call.1} parent=1 // loop_header_branch
      %28 = sbr.rel (%p26) target = $region8
    $region5: #{tpu_custom_call.1} parent=1 // loop_body
      %s30 = ssub.s32 %s25, 1
      %s31 = ssub.s32 %s25, 2
      %s38 = sadd.s32 1, %s33
      %p39 = scmp.ge.s32.totalorder %s38, 1
      %s40 = scalar_select %p39, 0, %s38
      %s41 = sadd.s32 1, %s32
      %s42 = scalar_select %p39, %s41, %s32
      %p43 = scmp.ge.s32.totalorder %s42, 2
      %s44 = scalar_select %p43, 0, %s42
      %s45 = ssub.s32 %s32, %s44
      %p46 = scmp.eq.s32.totalorder %s45, 0
      %s48 = sadd.s32 %s47, 1
      %s49 = scalar_select %p46, %s47, %s48
      %p52 = pneg %p46
      %p53 = scmp.eq.s32.totalorder %s25, 1
      %p54 = por %p52, %p53
      %p55 = scmp.ne.s32.totalorder %s47, %s50
      %p56 = scmp.eq.s32.totalorder %s25, 0
      %p57 = por %p55, %p56
      %p58 = scmp.ne.s32.totalorder %s47, %s50
      %p59 = scmp.eq.s32.totalorder %s30, 1
      %p60 = por %p58, %p59
      %p61 = scmp.ne.s32.totalorder %s50, %s51
      %p62 = scmp.eq.s32.totalorder %s30, 0
      %p63 = por %p61, %p62
      %p64 = scmp.ne.s32.totalorder %s50, %s51
      %p65 = scmp.eq.s32.totalorder %s31, 1
      %p66 = por %p64, %p65
      %p68 = scmp.ne.s32.totalorder %s51, %s67
      %p69 = scmp.eq.s32.totalorder %s31, 0
      %p70 = por %p68, %p69
      %s72 = sadd.s32 %s71, 1
      %p75 = scmp.eq.s32.totalorder %s25, 1
      %p76 = scmp.ne.s32.totalorder %s71, %s73
      %p77 = scmp.eq.s32.totalorder %s25, 0
      %p78 = por %p76, %p77
      %p79 = scmp.ne.s32.totalorder %s71, %s73
      %p80 = scmp.eq.s32.totalorder %s30, 1
      %p81 = por %p79, %p80
      %p82 = scmp.ne.s32.totalorder %s73, %s74
      %p83 = scmp.eq.s32.totalorder %s30, 0
      %p84 = por %p82, %p83
      %p85 = scmp.ne.s32.totalorder %s73, %s74
      %p86 = scmp.eq.s32.totalorder %s31, 1
      %p87 = por %p85, %p86
      %p89 = scmp.ne.s32.totalorder %s74, %s88
      %p90 = scmp.eq.s32.totalorder %s31, 0
      %p91 = por %p89, %p90
      %s93 = sadd.s32 %s92, 1
      %p96 = scmp.eq.s32.totalorder %s25, 1
      %p97 = scmp.ne.s32.totalorder %s92, %s94
      %p98 = scmp.eq.s32.totalorder %s25, 0
      %p99 = por %p97, %p98
      %p100 = scmp.ne.s32.totalorder %s92, %s94
      %p101 = scmp.eq.s32.totalorder %s30, 1
      %p102 = por %p100, %p101
      %p103 = scmp.ne.s32.totalorder %s94, %s95
      %p104 = scmp.eq.s32.totalorder %s30, 0
      %p105 = por %p103, %p104
      %p106 = scmp.ne.s32.totalorder %s94, %s95
      %p107 = scmp.eq.s32.totalorder %s31, 1
      %p108 = por %p106, %p107
      %p110 = scmp.ne.s32.totalorder %s95, %s109
      %p111 = scmp.eq.s32.totalorder %s31, 0
      %p112 = por %p110, %p111
      %s114 = sadd.s32 %s113, 1
      %p117 = scmp.eq.s32.totalorder %s25, 1
      %p118 = scmp.ne.s32.totalorder %s113, %s115
      %p119 = scmp.eq.s32.totalorder %s25, 0
      %p120 = por %p118, %p119
      %p121 = scmp.ne.s32.totalorder %s113, %s115
      %p122 = scmp.eq.s32.totalorder %s30, 1
      %p123 = por %p121, %p122
      %p124 = scmp.ne.s32.totalorder %s115, %s116
      %p125 = scmp.eq.s32.totalorder %s30, 0
      %p126 = por %p124, %p125
      %p127 = scmp.ne.s32.totalorder %s115, %s116
      %p128 = scmp.eq.s32.totalorder %s31, 1
      %p129 = por %p127, %p128
      %p131 = scmp.ne.s32.totalorder %s116, %s130
      %p132 = scmp.eq.s32.totalorder %s31, 0
      %p133 = por %p131, %p132
      %s135 = sadd.s32 %s134, 1
      %p138 = scmp.eq.s32.totalorder %s25, 1
      %p139 = scmp.ne.s32.totalorder %s134, %s136
      %p140 = scmp.eq.s32.totalorder %s25, 0
      %p141 = por %p139, %p140
      %p142 = scmp.ne.s32.totalorder %s134, %s136
      %p143 = scmp.eq.s32.totalorder %s30, 1
      %p144 = por %p142, %p143
      %p145 = scmp.ne.s32.totalorder %s136, %s137
      %p146 = scmp.eq.s32.totalorder %s30, 0
      %p147 = por %p145, %p146
      %p148 = scmp.ne.s32.totalorder %s136, %s137
      %p149 = scmp.eq.s32.totalorder %s31, 1
      %p150 = por %p148, %p149
      %p152 = scmp.ne.s32.totalorder %s137, %s151
      %p153 = scmp.eq.s32.totalorder %s31, 0
      %p154 = por %p152, %p153
      %s156 = sadd.s32 %s155, 1
      %p159 = scmp.eq.s32.totalorder %s25, 1
      %p160 = scmp.ne.s32.totalorder %s155, %s157
      %p161 = scmp.eq.s32.totalorder %s25, 0
      %p162 = por %p160, %p161
      %p163 = scmp.ne.s32.totalorder %s155, %s157
      %p164 = scmp.eq.s32.totalorder %s30, 1
      %p165 = por %p163, %p164
      %p166 = scmp.ne.s32.totalorder %s157, %s158
      %p167 = scmp.eq.s32.totalorder %s30, 0
      %p168 = por %p166, %p167
      %p169 = scmp.ne.s32.totalorder %s157, %s158
      %p170 = scmp.eq.s32.totalorder %s31, 1
      %p171 = por %p169, %p170
      %p173 = scmp.ne.s32.totalorder %s158, %s172
      %p174 = scmp.eq.s32.totalorder %s31, 0
      %p175 = por %p173, %p174
      %s177 = sadd.s32 %s176, 1
      %p180 = scmp.eq.s32.totalorder %s25, 1
      %p181 = scmp.ne.s32.totalorder %s176, %s178
      %p182 = scmp.eq.s32.totalorder %s25, 0
      %p183 = por %p181, %p182
      %p184 = scmp.ne.s32.totalorder %s176, %s178
      %p185 = scmp.eq.s32.totalorder %s30, 1
      %p186 = por %p184, %p185
      %p187 = scmp.ne.s32.totalorder %s178, %s179
      %p188 = scmp.eq.s32.totalorder %s30, 0
      %p189 = por %p187, %p188
      %p190 = scmp.ne.s32.totalorder %s178, %s179
      %p191 = scmp.eq.s32.totalorder %s31, 1
      %p192 = por %p190, %p191
      %p194 = scmp.ne.s32.totalorder %s179, %s193
      %p195 = scmp.eq.s32.totalorder %s31, 0
      %p196 = por %p194, %p195
      %s198 = sadd.s32 %s197, 1
      %p201 = scmp.eq.s32.totalorder %s25, 1
      %p202 = scmp.ne.s32.totalorder %s197, %s199
      %p203 = scmp.eq.s32.totalorder %s25, 0
      %p204 = por %p202, %p203
      %p205 = scmp.ne.s32.totalorder %s197, %s199
      %p206 = scmp.eq.s32.totalorder %s30, 1
      %p207 = por %p205, %p206
      %p208 = scmp.ne.s32.totalorder %s199, %s200
      %p209 = scmp.eq.s32.totalorder %s30, 0
      %p210 = por %p208, %p209
      %p211 = scmp.ne.s32.totalorder %s199, %s200
      %p212 = scmp.eq.s32.totalorder %s31, 1
      %p213 = por %p211, %p212
      %p215 = scmp.ne.s32.totalorder %s200, %s214
      %p216 = scmp.eq.s32.totalorder %s31, 0
      %p217 = por %p215, %p216
      %s219 = sadd.s32 %s218, 1
      %p222 = scmp.eq.s32.totalorder %s25, 1
      %p223 = scmp.ne.s32.totalorder %s218, %s220
      %p224 = scmp.eq.s32.totalorder %s25, 0
      %p225 = por %p223, %p224
      %p226 = scmp.ne.s32.totalorder %s218, %s220
      %p227 = scmp.eq.s32.totalorder %s30, 1
      %p228 = por %p226, %p227
      %p229 = scmp.ne.s32.totalorder %s220, %s221
      %p230 = scmp.eq.s32.totalorder %s30, 0
      %p231 = por %p229, %p230
      %p232 = scmp.ne.s32.totalorder %s220, %s221
      %p233 = scmp.eq.s32.totalorder %s31, 1
      %p234 = por %p232, %p233
      %p236 = scmp.ne.s32.totalorder %s221, %s235
      %p237 = scmp.eq.s32.totalorder %s31, 0
      %p238 = por %p236, %p237
      %s240 = sadd.s32 %s239, 1
      %p243 = scmp.eq.s32.totalorder %s25, 1
      %p244 = scmp.ne.s32.totalorder %s239, %s241
      %p245 = scmp.eq.s32.totalorder %s25, 0
      %p246 = por %p244, %p245
      %p247 = scmp.ne.s32.totalorder %s239, %s241
      %p248 = scmp.eq.s32.totalorder %s30, 1
      %p249 = por %p247, %p248
      %p250 = scmp.ne.s32.totalorder %s241, %s242
      %p251 = scmp.eq.s32.totalorder %s30, 0
      %p252 = por %p250, %p251
      %p253 = scmp.ne.s32.totalorder %s241, %s242
      %p254 = scmp.eq.s32.totalorder %s31, 1
      %p255 = por %p253, %p254
      %p257 = scmp.ne.s32.totalorder %s242, %s256
      %p258 = scmp.eq.s32.totalorder %s31, 0
      %p259 = por %p257, %p258
      %s261 = sadd.s32 %s260, 1
      %p264 = scmp.eq.s32.totalorder %s25, 1
      %p265 = scmp.ne.s32.totalorder %s260, %s262
      %p266 = scmp.eq.s32.totalorder %s25, 0
      %p267 = por %p265, %p266
      %p268 = scmp.ne.s32.totalorder %s260, %s262
      %p269 = scmp.eq.s32.totalorder %s30, 1
      %p270 = por %p268, %p269
      %p271 = scmp.ne.s32.totalorder %s262, %s263
      %p272 = scmp.eq.s32.totalorder %s30, 0
      %p273 = por %p271, %p272
      %p274 = scmp.ne.s32.totalorder %s262, %s263
      %p275 = scmp.eq.s32.totalorder %s31, 1
      %p276 = por %p274, %p275
      %p278 = scmp.ne.s32.totalorder %s263, %s277
      %p279 = scmp.eq.s32.totalorder %s31, 0
      %p280 = por %p278, %p279
      %s282 = sadd.s32 %s281, 1
      %p285 = scmp.eq.s32.totalorder %s25, 1
      %p286 = scmp.ne.s32.totalorder %s281, %s283
      %p287 = scmp.eq.s32.totalorder %s25, 0
      %p288 = por %p286, %p287
      %p289 = scmp.ne.s32.totalorder %s281, %s283
      %p290 = scmp.eq.s32.totalorder %s30, 1
      %p291 = por %p289, %p290
      %p292 = scmp.ne.s32.totalorder %s283, %s284
      %p293 = scmp.eq.s32.totalorder %s30, 0
      %p294 = por %p292, %p293
      %p295 = scmp.ne.s32.totalorder %s283, %s284
      %p296 = scmp.eq.s32.totalorder %s31, 1
      %p297 = por %p295, %p296
      %p299 = scmp.ne.s32.totalorder %s284, %s298
      %p300 = scmp.eq.s32.totalorder %s31, 0
      %p301 = por %p299, %p300
      %s303 = sadd.s32 %s302, 1
      %p306 = scmp.eq.s32.totalorder %s25, 1
      %p307 = scmp.ne.s32.totalorder %s302, %s304
      %p308 = scmp.eq.s32.totalorder %s25, 0
      %p309 = por %p307, %p308
      %p310 = scmp.ne.s32.totalorder %s302, %s304
      %p311 = scmp.eq.s32.totalorder %s30, 1
      %p312 = por %p310, %p311
      %p313 = scmp.ne.s32.totalorder %s304, %s305
      %p314 = scmp.eq.s32.totalorder %s30, 0
      %p315 = por %p313, %p314
      %p316 = scmp.ne.s32.totalorder %s304, %s305
      %p317 = scmp.eq.s32.totalorder %s31, 1
      %p318 = por %p316, %p317
      %p320 = scmp.ne.s32.totalorder %s305, %s319
      %p321 = scmp.eq.s32.totalorder %s31, 0
      %p322 = por %p320, %p321
      %s324 = sadd.s32 %s323, 1
      %p327 = scmp.eq.s32.totalorder %s25, 1
      %p328 = scmp.ne.s32.totalorder %s323, %s325
      %p329 = scmp.eq.s32.totalorder %s25, 0
      %p330 = por %p328, %p329
      %p331 = scmp.ne.s32.totalorder %s323, %s325
      %p332 = scmp.eq.s32.totalorder %s30, 1
      %p333 = por %p331, %p332
      %p334 = scmp.ne.s32.totalorder %s325, %s326
      %p335 = scmp.eq.s32.totalorder %s30, 0
      %p336 = por %p334, %p335
      %p337 = scmp.ne.s32.totalorder %s325, %s326
      %p338 = scmp.eq.s32.totalorder %s31, 1
      %p339 = por %p337, %p338
      %p341 = scmp.ne.s32.totalorder %s326, %s340
      %p342 = scmp.eq.s32.totalorder %s31, 0
      %p343 = por %p341, %p342
      %s344 = ssub.s32 %s32, %s44
      %s345 = ssub.s32 %s33, %s40
      %s346 = sor.u32 %s344, %s345
      %p347 = scmp.eq.s32.totalorder %s346, 0
      %s349 = sadd.s32 %s348, 1
      %s350 = scalar_select %p347, %s348, %s349
      %p353 = pneg %p347
      %p354 = scmp.eq.s32.totalorder %s25, 1
      %p355 = por %p353, %p354
      %p356 = scmp.ne.s32.totalorder %s348, %s351
      %p357 = scmp.eq.s32.totalorder %s25, 0
      %p358 = por %p356, %p357
      %p359 = scmp.ne.s32.totalorder %s348, %s351
      %p360 = scmp.eq.s32.totalorder %s30, 1
      %p361 = por %p359, %p360
      %p362 = scmp.ne.s32.totalorder %s351, %s352
      %p363 = scmp.eq.s32.totalorder %s30, 0
      %p364 = por %p362, %p363
      %p365 = scmp.ne.s32.totalorder %s351, %s352
      %p366 = scmp.eq.s32.totalorder %s31, 1
      %p367 = por %p365, %p366
      %p369 = scmp.ne.s32.totalorder %s352, %s368
      %p370 = scmp.eq.s32.totalorder %s31, 0
      %p371 = por %p369, %p370
      %p372 = scmp.le.s32.totalorder 1, %s25
      %p373 = scmp.lt.s32.totalorder %s25, 3
      %p374 = pnand %p372, %p373
      %p375 = pneg %p374
      // Predicated region
      $region9: #{tpu_custom_call.1} parent=5 // pred_check
        _
      $region10: #{tpu_custom_call.1} parent=5 // pred_check_branch
        %377 = sbr.rel (%p374) target = $region12
      $region11: #{tpu_custom_call.1} parent=5 // pred_region
        %s378 = ssub.s32 %s25, 1
        // Predicated region
        $region13: #{tpu_custom_call.1} parent=11 // pred_check
          %p379 = pneg %p84
        $region14: #{tpu_custom_call.1} parent=11 // pred_check_branch
          %381 = sbr.rel (%p379) target = $region16
        $region15: #{tpu_custom_call.1} parent=11 // pred_region
          _
        $region16: #{tpu_custom_call.1} parent=11 // pred_fallthru
          _
        // Predicated region
        $region17: #{tpu_custom_call.1} parent=11 // pred_check
          %p382 = pneg %p105
        $region18: #{tpu_custom_call.1} parent=11 // pred_check_branch
          %384 = sbr.rel (%p382) target = $region20
        $region19: #{tpu_custom_call.1} parent=11 // pred_region
          _
        $region20: #{tpu_custom_call.1} parent=11 // pred_fallthru
          _
        // Predicated region
        $region21: #{tpu_custom_call.1} parent=11 // pred_check
          %p385 = pneg %p126
        $region22: #{tpu_custom_call.1} parent=11 // pred_check_branch
          %387 = sbr.rel (%p385) target = $region24
        $region23: #{tpu_custom_call.1} parent=11 // pred_region
          _
        $region24: #{tpu_custom_call.1} parent=11 // pred_fallthru
          _
        // Predicated region
        $region25: #{tpu_custom_call.1} parent=11 // pred_check
          %p388 = pneg %p147
        $region26: #{tpu_custom_call.1} parent=11 // pred_check_branch
          %390 = sbr.rel (%p388) target = $region28
        $region27: #{tpu_custom_call.1} parent=11 // pred_region
          _
        $region28: #{tpu_custom_call.1} parent=11 // pred_fallthru
          _
        // Predicated region
        $region29: #{tpu_custom_call.1} parent=11 // pred_check
          %p391 = pneg %p168
        $region30: #{tpu_custom_call.1} parent=11 // pred_check_branch
          %393 = sbr.rel (%p391) target = $region32
        $region31: #{tpu_custom_call.1} parent=11 // pred_region
          _
        $region32: #{tpu_custom_call.1} parent=11 // pred_fallthru
          _
        // Predicated region
        $region33: #{tpu_custom_call.1} parent=11 // pred_check
          %p394 = pneg %p189
        $region34: #{tpu_custom_call.1} parent=11 // pred_check_branch
          %396 = sbr.rel (%p394) target = $region36
        $region35: #{tpu_custom_call.1} parent=11 // pred_region
          _
        $region36: #{tpu_custom_call.1} parent=11 // pred_fallthru
          _
        // Predicated region
        $region37: #{tpu_custom_call.1} parent=11 // pred_check
          %p397 = pneg %p210
        $region38: #{tpu_custom_call.1} parent=11 // pred_check_branch
          %399 = sbr.rel (%p397) target = $region40
        $region39: #{tpu_custom_call.1} parent=11 // pred_region
          _
        $region40: #{tpu_custom_call.1} parent=11 // pred_fallthru
          _
        // Predicated region
        $region41: #{tpu_custom_call.1} parent=11 // pred_check
          %p400 = pneg %p231
        $region42: #{tpu_custom_call.1} parent=11 // pred_check_branch
          %402 = sbr.rel (%p400) target = $region44
        $region43: #{tpu_custom_call.1} parent=11 // pred_region
          _
        $region44: #{tpu_custom_call.1} parent=11 // pred_fallthru
          _
        // Predicated region
        $region45: #{tpu_custom_call.1} parent=11 // pred_check
          %p403 = pneg %p252
        $region46: #{tpu_custom_call.1} parent=11 // pred_check_branch
          %405 = sbr.rel (%p403) target = $region48
        $region47: #{tpu_custom_call.1} parent=11 // pred_region
          _
        $region48: #{tpu_custom_call.1} parent=11 // pred_fallthru
          _
        // Predicated region
        $region49: #{tpu_custom_call.1} parent=11 // pred_check
          %p406 = pneg %p273
        $region50: #{tpu_custom_call.1} parent=11 // pred_check_branch
          %408 = sbr.rel (%p406) target = $region52
        $region51: #{tpu_custom_call.1} parent=11 // pred_region
          %s410 = ssub.s32 256, 256
          %411 = vsyncadd [#allocation3], %s410
          %s412 = sshll.u32 [#allocation2], 4
          %s413 = int_to_ptr.vmem [resolvable:$true] %s412
          %418 = dma.hbm_to_vmem [thread:$0]  %s10, 256, %s413, [#allocation3], 64, 64, 4
        $region52: #{tpu_custom_call.1} parent=11 // pred_fallthru
          _
        // Predicated region
        $region53: #{tpu_custom_call.1} parent=11 // pred_check
          %p419 = pneg %p294
        $region54: #{tpu_custom_call.1} parent=11 // pred_check_branch
          %421 = sbr.rel (%p419) target = $region56
        $region55: #{tpu_custom_call.1} parent=11 // pred_region
          %s423 = ssub.s32 16, 16
          %424 = vsyncadd [#allocation6], %s423
          %s426 = sshll.u32 [#allocation5], 4
          %s427 = int_to_ptr.vmem [resolvable:$true] %s426
          %429 = dma.hbm_to_vmem [thread:$0]  %s11, 16, %s427, [#allocation6]
        $region56: #{tpu_custom_call.1} parent=11 // pred_fallthru
          _
        // Predicated region
        $region57: #{tpu_custom_call.1} parent=11 // pred_check
          %p430 = pneg %p315
        $region58: #{tpu_custom_call.1} parent=11 // pred_check_branch
          %432 = sbr.rel (%p430) target = $region60
        $region59: #{tpu_custom_call.1} parent=11 // pred_region
          _
        $region60: #{tpu_custom_call.1} parent=11 // pred_fallthru
          _
        // Predicated region
        $region61: #{tpu_custom_call.1} parent=11 // pred_check
          %p433 = pneg %p336
        $region62: #{tpu_custom_call.1} parent=11 // pred_check_branch
          %435 = sbr.rel (%p433) target = $region64
        $region63: #{tpu_custom_call.1} parent=11 // pred_region
          _
        $region64: #{tpu_custom_call.1} parent=11 // pred_fallthru
          _
      $region12: #{tpu_custom_call.1} parent=5 // pred_fallthru
        _
      %p436 = scmp.lt.s32.totalorder %s25, 2
      // Predicated region
      $region65: #{tpu_custom_call.1} parent=5 // pred_check
        %p437 = pneg %p436
      $region66: #{tpu_custom_call.1} parent=5 // pred_check_branch
        %439 = sbr.rel (%p437) target = $region68
      $region67: #{tpu_custom_call.1} parent=5 // pred_region
        // Predicated region
        $region69: #{tpu_custom_call.1} parent=67 // pred_check
          %p440 = pneg %p57
        $region70: #{tpu_custom_call.1} parent=67 // pred_check_branch
          %442 = sbr.rel (%p440) target = $region72
        $region71: #{tpu_custom_call.1} parent=67 // pred_region
          %p443 = scmp.lt.s32.totalorder %s32, 1
          %s444 = scalar_select %p443, %s32, 1
          %s445 = smul.addr %s444, 8
          %s446 = scalar_lea.vmem %s0, %s445
        $region72: #{tpu_custom_call.1} parent=67 // pred_fallthru
          _
      $region68: #{tpu_custom_call.1} parent=5 // pred_fallthru
        _
      %p447 = scmp.le.s32.totalorder 1, %s25
      %p448 = scmp.lt.s32.totalorder %s25, 3
      %p449 = pnand %p447, %p448
      %p450 = pneg %p449
      // Predicated region
      $region73: #{tpu_custom_call.1} parent=5 // pred_check
        _
      $region74: #{tpu_custom_call.1} parent=5 // pred_check_branch
        %452 = sbr.rel (%p449) target = $region76
      $region75: #{tpu_custom_call.1} parent=5 // pred_region
        %s453 = ssub.s32 %s25, 1
        // Predicated region
        $region77: #{tpu_custom_call.1} parent=75 // pred_check
          %p454 = pneg %p273
        $region78: #{tpu_custom_call.1} parent=75 // pred_check_branch
          %456 = sbr.rel (%p454) target = $region80
        $region79: #{tpu_custom_call.1} parent=75 // pred_region
          %457 = dma.done [#allocation3], 256
        $region80: #{tpu_custom_call.1} parent=75 // pred_fallthru
          _
        // Predicated region
        $region81: #{tpu_custom_call.1} parent=75 // pred_check
          %p458 = pneg %p294
        $region82: #{tpu_custom_call.1} parent=75 // pred_check_branch
          %460 = sbr.rel (%p458) target = $region84
        $region83: #{tpu_custom_call.1} parent=75 // pred_region
          %461 = dma.done [#allocation6], 16
        $region84: #{tpu_custom_call.1} parent=75 // pred_fallthru
          _
        %p462 = scmp.lt.s32.totalorder %s34, 1
        %s463 = scalar_select %p462, %s34, 1
        %s464 = smul.addr %s463, 8
        %s465 = scalar_lea.vmem %s0, %s464
        %p466 = pneg %p63
        %p467 = pneg %p60
        %p468 = pneg %p84
        %p469 = pneg %p81
        %p470 = pneg %p105
        %p471 = pneg %p102
        %p472 = pneg %p126
        %p473 = pneg %p123
        %p474 = pneg %p147
        %p475 = pneg %p144
        %p476 = pneg %p168
        %p477 = pneg %p165
        %p478 = pneg %p189
        %p479 = pneg %p186
        %p480 = pneg %p210
        %p481 = pneg %p207
        %p482 = pneg %p231
        %p483 = pneg %p228
        %p484 = pneg %p252
        %p485 = pneg %p249
        %p486 = pneg %p273
        %p487 = pneg %p270
        %p488 = pneg %p294
        %p489 = pneg %p291
        %p490 = pneg %p315
        %p491 = pneg %p312
        %p492 = pneg %p336
        %p493 = pneg %p333
        %p494 = pneg %p364
        %p495 = pneg %p361
        %s496 = sand.u32 %s351, 1
        %s497 = scalar_lea.sflag [#allocation4], %s496
        %s498 = sand.u32 %s351, 1
        %s499 = smul.addr %s498, 8
        %s500 = scalar_lea.vmem [#allocation7], %s499
        %p501 = scmp.lt.s32.totalorder %s34, 1
        %s502 = scalar_select %p501, %s34, 1
        %s503 = smul.addr %s502, 8
        %s504 = scalar_lea.vmem %s0, %s503
        %s506 = smul.u32 %s35, 8
        %s507 = scalar_lea.vmem %s504, %s506
        %v508 = vld [vmem:[%s507] sm:$0xff]
        %v509 = vld [vmem:[%s504] sm:$0xff]
        %v510 = vld [vmem:[%s1] sm:$0x1]
        %v511 = vld [vmem:[%s2] sm:$0x1]
        %vm512 = vcmask 261120
        %v513 = vsel %vm512, %v508, 0.0
        %514 = vadd.xlane.f32.xlu0 %v513
        %v515 = vpop.xlane.xlu0 %514
        %v516 = vrcp.pop 32.0
        %v517 = vmul.f32 %v515, %v516
        %v518 = vmul.f32 %v508, %v508
        %v519 = vsel %vm512, %v518, 0.0
        %520 = vadd.xlane.f32.xlu0 %v519
        %v521 = vpop.xlane.xlu0 %520
        %v522 = vmul.f32 %v521, %v516
        %v523 = vmul.f32 %v517, %v517
        %v524 = vsub.f32 %v522, %v523
        %v525 = vsub.f32 %v508, %v517
        %v526 = vadd.f32 %v524, 1e-05
        %v527 = vrsqrt.pop %v526
        %v528 = vmul.f32 %v525, %v527
        %v530 = vlaneseq
        %v531 = vshrl.u32 %v530, 7
        %v532 = vsub.s32 0, %v531
        %v533 = vrot.slane %v510, %v532
        %v535 = vmul.f32 %v528, %v533
        %v537 = vlaneseq
        %v538 = vshrl.u32 %v537, 7
        %v539 = vsub.s32 0, %v538
        %v540 = vrot.slane %v511, %v539
        %v542 = vadd.f32 %v535, %v540
        %v543 = vsel %vm512, %v509, 0.0
        %544 = vadd.xlane.f32.xlu0 %v543
        %v545 = vpop.xlane.xlu0 %544
        %v546 = vmul.f32 %v545, %v516
        %v547 = vmul.f32 %v509, %v509
        %v548 = vsel %vm512, %v547, 0.0
        %549 = vadd.xlane.f32.xlu0 %v548
        %v550 = vpop.xlane.xlu0 %549
        %v551 = vmul.f32 %v550, %v516
        %v552 = vmul.f32 %v546, %v546
        %v553 = vsub.f32 %v551, %v552
        %v554 = vsub.f32 %v509, %v546
        %v555 = vadd.f32 %v553, 1e-05
        %v556 = vrsqrt.pop %v555
        %v557 = vmul.f32 %v554, %v556
        %v558 = vmul.f32 %v557, %v533
        %v559 = vadd.f32 %v558, %v540
        %v560 = vpack.c.bf16 %v542, %v542
        %v561 = vpack.c.bf16 %v559, %v559
        %v562 = vld [vmem:[%s5] sm:$0xf]
        %v563 = vld [vmem:[%s5 + $0x4] sm:$0xf]
        %v564 = vld [vmem:[%s5 + $0x8] sm:$0xf]
        %v565 = vld [vmem:[%s5 + $0xc] sm:$0xf]
        %v570 = vunpack.c.l.b16 %v562
        %v571 = vunpack.c.l.b16 %v563
        %v572 = vunpack.c.l.b16 %v564
        %v573 = vunpack.c.l.b16 %v565
        %v574 = vpack.c.b16 %v571, %v570
        %v575 = vpack.c.b16 %v573, %v572
        %v579 = vsel %vm512, %v560, 0
        %581 = vmatprep.subr.bf16.mxu0 0
        %582 = vmatpush1.bf16.msra.mxu0 0
        %583 = vmatprep.subr.bf16.mxu0 0
        %584 = vmatpush1.bf16.msra.mxu0 0
        %585 = vmatprep.subr.bf16.mxu0 0
        %586 = vmatpush1.bf16.msra.mxu0 0
        %587 = vmatprep.subr.bf16.mxu0 0
        %588 = vmatpush1.bf16.msra.mxu0 0
        %589 = vmatprep.subr.bf16.mxu0 0
        %590 = vmatpush1.bf16.msra.mxu0 0
        %591 = vmatprep.subr.bf16.mxu0 0
        %592 = vmatpush1.bf16.msra.mxu0 0
        %593 = vmatprep.subr.bf16.mxu0 0
        %594 = vmatpush1.bf16.msra.mxu0 %v575
        %595 = vmatprep.subr.bf16.mxu0 0
        %596 = vmatpush1.bf16.msra.mxu0 %v574
        %597 = vmatprep.subr.bf16.mxu0 0
        %598 = vmatpush2.bf16.msra.mxu0 0
        %599 = vmatprep.subr.bf16.mxu0 0
        %600 = vmatpush2.bf16.msra.mxu0 0
        %601 = vmatprep.subr.bf16.mxu0 0
        %602 = vmatpush2.bf16.msra.mxu0 0
        %603 = vmatprep.subr.bf16.mxu0 0
        %604 = vmatpush2.bf16.msra.mxu0 0
        %605 = vmatprep.subr.bf16.mxu0 0
        %606 = vmatpush2.bf16.msra.mxu0 0
        %607 = vmatprep.subr.bf16.mxu0 0
        %608 = vmatpush2.bf16.msra.mxu0 0
        %609 = vmatprep.subr.bf16.mxu0 0
        %610 = vmatpush2.bf16.msra.mxu0 0
        %611 = vmatprep.subr.bf16.mxu0 0
        %612 = vmatpush2.bf16.msra.mxu0 0
        %613 = vmatprep.mubr.bf16.mxu0 0
        %614 = vmatmul.mubr.bf16.gmra.mxu0 %v579
        %v615 = vpop.f32.mrf.mxu0
        %v616 = vadd.f32 0.0, %v615
        %v617 = vpop.f32.mrf.mxu0
        %v618 = vpop.f32.mrf.mxu0
        %v619 = vpop.f32.mrf.mxu0
        %620 = vdwg.mxu0
        %v621 = vld [vmem:[%s6] sm:$0xf]
        %v622 = vld [vmem:[%s6 + $0x4] sm:$0xf]
        %v623 = vld [vmem:[%s6 + $0x8] sm:$0xf]
        %v624 = vld [vmem:[%s6 + $0xc] sm:$0xf]
        %v629 = vunpack.c.l.b16 %v621
        %v630 = vunpack.c.l.b16 %v622
        %v631 = vunpack.c.l.b16 %v623
        %v632 = vunpack.c.l.b16 %v624
        %v633 = vpack.c.b16 %v630, %v629
        %v634 = vpack.c.b16 %v632, %v631
        %v638 = vsel %vm512, %v561, 0
        %640 = vmatprep.subr.bf16.mxu0 0
        %641 = vmatpush1.bf16.msra.mxu0 0
        %642 = vmatprep.subr.bf16.mxu0 0
        %643 = vmatpush1.bf16.msra.mxu0 0
        %644 = vmatprep.subr.bf16.mxu0 0
        %645 = vmatpush1.bf16.msra.mxu0 0
        %646 = vmatprep.subr.bf16.mxu0 0
        %647 = vmatpush1.bf16.msra.mxu0 0
        %648 = vmatprep.subr.bf16.mxu0 0
        %649 = vmatpush1.bf16.msra.mxu0 0
        %650 = vmatprep.subr.bf16.mxu0 0
        %651 = vmatpush1.bf16.msra.mxu0 0
        %652 = vmatprep.subr.bf16.mxu0 0
        %653 = vmatpush1.bf16.msra.mxu0 %v634
        %654 = vmatprep.subr.bf16.mxu0 0
        %655 = vmatpush1.bf16.msra.mxu0 %v633
        %656 = vmatprep.subr.bf16.mxu0 0
        %657 = vmatpush2.bf16.msra.mxu0 0
        %658 = vmatprep.subr.bf16.mxu0 0
        %659 = vmatpush2.bf16.msra.mxu0 0
        %660 = vmatprep.subr.bf16.mxu0 0
        %661 = vmatpush2.bf16.msra.mxu0 0
        %662 = vmatprep.subr.bf16.mxu0 0
        %663 = vmatpush2.bf16.msra.mxu0 0
        %664 = vmatprep.subr.bf16.mxu0 0
        %665 = vmatpush2.bf16.msra.mxu0 0
        %666 = vmatprep.subr.bf16.mxu0 0
        %667 = vmatpush2.bf16.msra.mxu0 0
        %668 = vmatprep.subr.bf16.mxu0 0
        %669 = vmatpush2.bf16.msra.mxu0 0
        %670 = vmatprep.subr.bf16.mxu0 0
        %671 = vmatpush2.bf16.msra.mxu0 0
        %672 = vmatprep.mubr.bf16.mxu0 0
        %673 = vmatmul.mubr.bf16.gmra.mxu0 %v638
        %v674 = vpop.f32.mrf.mxu0
        %v675 = vadd.f32 0.0, %v674
        %v676 = vpop.f32.mrf.mxu0
        %v677 = vpop.f32.mrf.mxu0
        %v678 = vpop.f32.mrf.mxu0
        %679 = vdwg.mxu0
        %v680 = vld [vmem:[%s7] sm:$0xf]
        %v681 = vld [vmem:[%s7 + $0x4] sm:$0xf]
        %v682 = vld [vmem:[%s7 + $0x8] sm:$0xf]
        %v683 = vld [vmem:[%s7 + $0xc] sm:$0xf]
        %v688 = vunpack.c.l.b16 %v680
        %v689 = vunpack.c.l.b16 %v681
        %v690 = vunpack.c.l.b16 %v682
        %v691 = vunpack.c.l.b16 %v683
        %v692 = vpack.c.b16 %v689, %v688
        %v693 = vpack.c.b16 %v691, %v690
        %696 = vmatprep.subr.bf16.mxu0 0
        %697 = vmatpush1.bf16.msra.mxu0 0
        %698 = vmatprep.subr.bf16.mxu0 0
        %699 = vmatpush1.bf16.msra.mxu0 0
        %700 = vmatprep.subr.bf16.mxu0 0
        %701 = vmatpush1.bf16.msra.mxu0 0
        %702 = vmatprep.subr.bf16.mxu0 0
        %703 = vmatpush1.bf16.msra.mxu0 0
        %704 = vmatprep.subr.bf16.mxu0 0
        %705 = vmatpush1.bf16.msra.mxu0 0
        %706 = vmatprep.subr.bf16.mxu0 0
        %707 = vmatpush1.bf16.msra.mxu0 0
        %708 = vmatprep.subr.bf16.mxu0 0
        %709 = vmatpush1.bf16.msra.mxu0 %v693
        %710 = vmatprep.subr.bf16.mxu0 0
        %711 = vmatpush1.bf16.msra.mxu0 %v692
        %712 = vmatprep.subr.bf16.mxu0 0
        %713 = vmatpush2.bf16.msra.mxu0 0
        %714 = vmatprep.subr.bf16.mxu0 0
        %715 = vmatpush2.bf16.msra.mxu0 0
        %716 = vmatprep.subr.bf16.mxu0 0
        %717 = vmatpush2.bf16.msra.mxu0 0
        %718 = vmatprep.subr.bf16.mxu0 0
        %719 = vmatpush2.bf16.msra.mxu0 0
        %720 = vmatprep.subr.bf16.mxu0 0
        %721 = vmatpush2.bf16.msra.mxu0 0
        %722 = vmatprep.subr.bf16.mxu0 0
        %723 = vmatpush2.bf16.msra.mxu0 0
        %724 = vmatprep.subr.bf16.mxu0 0
        %725 = vmatpush2.bf16.msra.mxu0 0
        %726 = vmatprep.subr.bf16.mxu0 0
        %727 = vmatpush2.bf16.msra.mxu0 0
        %728 = vmatprep.mubr.bf16.mxu0 0
        %729 = vmatmul.mubr.bf16.gmra.mxu0 %v638
        %v730 = vpop.f32.mrf.mxu0
        %v731 = vadd.f32 0.0, %v730
        %v732 = vpop.f32.mrf.mxu0
        %v733 = vpop.f32.mrf.mxu0
        %v734 = vpop.f32.mrf.mxu0
        %735 = vdwg.mxu0
        %v736 = vlaneseq
        %v737 = vshrl.u32 %v736, 7
        %v738 = vstv %s506
        %v739 = vadd.s32 %v737, %v738
        %v740 = vlaneseq
        %v741 = vand.u32 %v740, 127
        %vm742 = vcmp.le.s32.totalorder %v741, %v739
        %v743 = vmul.f32 %v616, 0.35355338
        %v744 = vpack.c.bf16 %v743, %v743
        %v745 = vpack.c.bf16 %v675, %v675
        %v746 = vpack.c.bf16 %v731, %v731
        %vm747 = vcmask 64512
        %v749 = vsel %vm747, %v744, 0
        %v752 = vsel %vm747, %v745, 0
        %754 = vmatprep.subr.bf16.mxu0 0
        %755 = vmatpush1.bf16.xpose.msra.mxu0 0
        %756 = vmatprep.subr.bf16.mxu0 0
        %757 = vmatpush1.bf16.xpose.msra.mxu0 0
        %758 = vmatprep.subr.bf16.mxu0 0
        %759 = vmatpush1.bf16.xpose.msra.mxu0 0
        %760 = vmatprep.subr.bf16.mxu0 0
        %761 = vmatpush1.bf16.xpose.msra.mxu0 0
        %762 = vmatprep.subr.bf16.mxu0 0
        %763 = vmatpush1.bf16.xpose.msra.mxu0 0
        %764 = vmatprep.subr.bf16.mxu0 0
        %765 = vmatpush1.bf16.xpose.msra.mxu0 0
        %766 = vmatprep.subr.bf16.mxu0 0
        %767 = vmatpush1.bf16.xpose.msra.mxu0 0
        %768 = vmatprep.subr.bf16.mxu0 0
        %769 = vmatpush1.bf16.xpose.msra.mxu0 %v752
        %770 = vmatprep.subr.bf16.mxu0 0
        %771 = vmatpush2.bf16.xpose.msra.mxu0 0
        %772 = vmatprep.subr.bf16.mxu0 0
        %773 = vmatpush2.bf16.xpose.msra.mxu0 0
        %774 = vmatprep.subr.bf16.mxu0 0
        %775 = vmatpush2.bf16.xpose.msra.mxu0 0
        %776 = vmatprep.subr.bf16.mxu0 0
        %777 = vmatpush2.bf16.xpose.msra.mxu0 0
        %778 = vmatprep.subr.bf16.mxu0 0
        %779 = vmatpush2.bf16.xpose.msra.mxu0 0
        %780 = vmatprep.subr.bf16.mxu0 0
        %781 = vmatpush2.bf16.xpose.msra.mxu0 0
        %782 = vmatprep.subr.bf16.mxu0 0
        %783 = vmatpush2.bf16.xpose.msra.mxu0 0
        %784 = vmatprep.subr.bf16.mxu0 0
        %785 = vmatpush2.bf16.xpose.msra.mxu0 0
        %786 = vmatprep.mubr.bf16.mxu0 0
        %787 = vmatmul.mubr.bf16.gmra.mxu0 %v749
        %v788 = vpop.f32.mrf.mxu0
        %v789 = vadd.f32 0.0, %v788
        %v790 = vpop.f32.mrf.mxu0
        %v791 = vpop.f32.mrf.mxu0
        %v792 = vpop.f32.mrf.mxu0
        %793 = vdwg.mxu0
        %v794 = vsel %vm742, %v789, -inf
        %v795 = vsel %vm747, %v794, -inf
        %796 = vmax.xlane.f32.xlu0 %v795
        %v797 = vpop.xlane.xlu0 %796
        %v798 = vsub.f32 %v794, %v797
        %v799 = vmul.f32 %v798, 1.442695
        %v800 = vpow.pop %v799
        %v801 = vsel %vm747, %v800, 0.0
        %802 = vadd.xlane.f32.xlu0 %v801
        %v803 = vpop.xlane.xlu0 %802
        %v804 = vpack.c.bf16 %v800, %v800
        %v806 = vsel %vm747, %v804, 0
        %vm808 = vcmask 1043456
        %v810 = vsel %vm808, %v746, 0
        %812 = vmatprep.subr.bf16.mxu0 0
        %813 = vmatpush1.bf16.msra.mxu0 0
        %814 = vmatprep.subr.bf16.mxu0 0
        %815 = vmatpush1.bf16.msra.mxu0 0
        %816 = vmatprep.subr.bf16.mxu0 0
        %817 = vmatpush1.bf16.msra.mxu0 0
        %818 = vmatprep.subr.bf16.mxu0 0
        %819 = vmatpush1.bf16.msra.mxu0 0
        %820 = vmatprep.subr.bf16.mxu0 0
        %821 = vmatpush1.bf16.msra.mxu0 0
        %822 = vmatprep.subr.bf16.mxu0 0
        %823 = vmatpush1.bf16.msra.mxu0 0
        %824 = vmatprep.subr.bf16.mxu0 0
        %825 = vmatpush1.bf16.msra.mxu0 0
        %826 = vmatprep.subr.bf16.mxu0 0
        %827 = vmatpush1.bf16.msra.mxu0 %v810
        %828 = vmatprep.subr.bf16.mxu0 0
        %829 = vmatpush2.bf16.msra.mxu0 0
        %830 = vmatprep.subr.bf16.mxu0 0
        %831 = vmatpush2.bf16.msra.mxu0 0
        %832 = vmatprep.subr.bf16.mxu0 0
        %833 = vmatpush2.bf16.msra.mxu0 0
        %834 = vmatprep.subr.bf16.mxu0 0
        %835 = vmatpush2.bf16.msra.mxu0 0
        %836 = vmatprep.subr.bf16.mxu0 0
        %837 = vmatpush2.bf16.msra.mxu0 0
        %838 = vmatprep.subr.bf16.mxu0 0
        %839 = vmatpush2.bf16.msra.mxu0 0
        %840 = vmatprep.subr.bf16.mxu0 0
        %841 = vmatpush2.bf16.msra.mxu0 0
        %842 = vmatprep.subr.bf16.mxu0 0
        %843 = vmatpush2.bf16.msra.mxu0 0
        %844 = vmatprep.mubr.bf16.mxu0 0
        %845 = vmatmul.mubr.bf16.gmra.mxu0 %v806
        %v846 = vpop.f32.mrf.mxu0
        %v847 = vadd.f32 0.0, %v846
        %v848 = vpop.f32.mrf.mxu0
        %v849 = vpop.f32.mrf.mxu0
        %v850 = vpop.f32.mrf.mxu0
        %851 = vdwg.mxu0
        %v852 = vrcp.pop %v803
        %v853 = vmul.f32 %v847, %v852
        %855 = vrot.lane.b32.xlu0 %v744, 120
        %v856 = vpop.permute.xlu0 %855
        %858 = vrot.lane.b32.xlu0 %v745, 120
        %v859 = vpop.permute.xlu0 %858
        %v861 = vsel %vm747, %v856, 0
        %v864 = vsel %vm747, %v859, 0
        %866 = vmatprep.subr.bf16.mxu0 0
        %867 = vmatpush1.bf16.xpose.msra.mxu0 0
        %868 = vmatprep.subr.bf16.mxu0 0
        %869 = vmatpush1.bf16.xpose.msra.mxu0 0
        %870 = vmatprep.subr.bf16.mxu0 0
        %871 = vmatpush1.bf16.xpose.msra.mxu0 0
        %872 = vmatprep.subr.bf16.mxu0 0
        %873 = vmatpush1.bf16.xpose.msra.mxu0 0
        %874 = vmatprep.subr.bf16.mxu0 0
        %875 = vmatpush1.bf16.xpose.msra.mxu0 0
        %876 = vmatprep.subr.bf16.mxu0 0
        %877 = vmatpush1.bf16.xpose.msra.mxu0 0
        %878 = vmatprep.subr.bf16.mxu0 0
        %879 = vmatpush1.bf16.xpose.msra.mxu0 0
        %880 = vmatprep.subr.bf16.mxu0 0
        %881 = vmatpush1.bf16.xpose.msra.mxu0 %v864
        %882 = vmatprep.subr.bf16.mxu0 0
        %883 = vmatpush2.bf16.xpose.msra.mxu0 0
        %884 = vmatprep.subr.bf16.mxu0 0
        %885 = vmatpush2.bf16.xpose.msra.mxu0 0
        %886 = vmatprep.subr.bf16.mxu0 0
        %887 = vmatpush2.bf16.xpose.msra.mxu0 0
        %888 = vmatprep.subr.bf16.mxu0 0
        %889 = vmatpush2.bf16.xpose.msra.mxu0 0
        %890 = vmatprep.subr.bf16.mxu0 0
        %891 = vmatpush2.bf16.xpose.msra.mxu0 0
        %892 = vmatprep.subr.bf16.mxu0 0
        %893 = vmatpush2.bf16.xpose.msra.mxu0 0
        %894 = vmatprep.subr.bf16.mxu0 0
        %895 = vmatpush2.bf16.xpose.msra.mxu0 0
        %896 = vmatprep.subr.bf16.mxu0 0
        %897 = vmatpush2.bf16.xpose.msra.mxu0 0
        %898 = vmatprep.mubr.bf16.mxu0 0
        %899 = vmatmul.mubr.bf16.gmra.mxu0 %v861
        %v900 = vpop.f32.mrf.mxu0
        %v901 = vadd.f32 0.0, %v900
        %v902 = vpop.f32.mrf.mxu0
        %v903 = vpop.f32.mrf.mxu0
        %v904 = vpop.f32.mrf.mxu0
        %905 = vdwg.mxu0
        %v906 = vsel %vm742, %v901, -inf
        %v907 = vsel %vm747, %v906, -inf
        %908 = vmax.xlane.f32.xlu0 %v907
        %v909 = vpop.xlane.xlu0 %908
        %v910 = vsub.f32 %v906, %v909
        %v911 = vmul.f32 %v910, 1.442695
        %v912 = vpow.pop %v911
        %v913 = vsel %vm747, %v912, 0.0
        %914 = vadd.xlane.f32.xlu0 %v913
        %v915 = vpop.xlane.xlu0 %914
        %v916 = vpack.c.bf16 %v912, %v912
        %918 = vrot.lane.b32.xlu0 %v746, 120
        %v919 = vpop.permute.xlu0 %918
        %v921 = vsel %vm747, %v916, 0
        %v924 = vsel %vm808, %v919, 0
        %926 = vmatprep.subr.bf16.mxu0 0
        %927 = vmatpush1.bf16.msra.mxu0 0
        %928 = vmatprep.subr.bf16.mxu0 0
        %929 = vmatpush1.bf16.msra.mxu0 0
        %930 = vmatprep.subr.bf16.mxu0 0
        %931 = vmatpush1.bf16.msra.mxu0 0
        %932 = vmatprep.subr.bf16.mxu0 0
        %933 = vmatpush1.bf16.msra.mxu0 0
        %934 = vmatprep.subr.bf16.mxu0 0
        %935 = vmatpush1.bf16.msra.mxu0 0
        %936 = vmatprep.subr.bf16.mxu0 0
        %937 = vmatpush1.bf16.msra.mxu0 0
        %938 = vmatprep.subr.bf16.mxu0 0
        %939 = vmatpush1.bf16.msra.mxu0 0
        %940 = vmatprep.subr.bf16.mxu0 0
        %941 = vmatpush1.bf16.msra.mxu0 %v924
        %942 = vmatprep.subr.bf16.mxu0 0
        %943 = vmatpush2.bf16.msra.mxu0 0
        %944 = vmatprep.subr.bf16.mxu0 0
        %945 = vmatpush2.bf16.msra.mxu0 0
        %946 = vmatprep.subr.bf16.mxu0 0
        %947 = vmatpush2.bf16.msra.mxu0 0
        %948 = vmatprep.subr.bf16.mxu0 0
        %949 = vmatpush2.bf16.msra.mxu0 0
        %950 = vmatprep.subr.bf16.mxu0 0
        %951 = vmatpush2.bf16.msra.mxu0 0
        %952 = vmatprep.subr.bf16.mxu0 0
        %953 = vmatpush2.bf16.msra.mxu0 0
        %954 = vmatprep.subr.bf16.mxu0 0
        %955 = vmatpush2.bf16.msra.mxu0 0
        %956 = vmatprep.subr.bf16.mxu0 0
        %957 = vmatpush2.bf16.msra.mxu0 0
        %958 = vmatprep.mubr.bf16.mxu0 0
        %959 = vmatmul.mubr.bf16.gmra.mxu0 %v921
        %v960 = vpop.f32.mrf.mxu0
        %v961 = vadd.f32 0.0, %v960
        %v962 = vpop.f32.mrf.mxu0
        %v963 = vpop.f32.mrf.mxu0
        %v964 = vpop.f32.mrf.mxu0
        %965 = vdwg.mxu0
        %v966 = vrcp.pop %v915
        %v967 = vmul.f32 %v961, %v966
        %968 = vrot.lane.b32.xlu0 %v744, 112
        %v969 = vpop.permute.xlu0 %968
        %970 = vrot.lane.b32.xlu0 %v745, 112
        %v971 = vpop.permute.xlu0 %970
        %v973 = vsel %vm747, %v969, 0
        %v976 = vsel %vm747, %v971, 0
        %978 = vmatprep.subr.bf16.mxu0 0
        %979 = vmatpush1.bf16.xpose.msra.mxu0 0
        %980 = vmatprep.subr.bf16.mxu0 0
        %981 = vmatpush1.bf16.xpose.msra.mxu0 0
        %982 = vmatprep.subr.bf16.mxu0 0
        %983 = vmatpush1.bf16.xpose.msra.mxu0 0
        %984 = vmatprep.subr.bf16.mxu0 0
        %985 = vmatpush1.bf16.xpose.msra.mxu0 0
        %986 = vmatprep.subr.bf16.mxu0 0
        %987 = vmatpush1.bf16.xpose.msra.mxu0 0
        %988 = vmatprep.subr.bf16.mxu0 0
        %989 = vmatpush1.bf16.xpose.msra.mxu0 0
        %990 = vmatprep.subr.bf16.mxu0 0
        %991 = vmatpush1.bf16.xpose.msra.mxu0 0
        %992 = vmatprep.subr.bf16.mxu0 0
        %993 = vmatpush1.bf16.xpose.msra.mxu0 %v976
        %994 = vmatprep.subr.bf16.mxu0 0
        %995 = vmatpush2.bf16.xpose.msra.mxu0 0
        %996 = vmatprep.subr.bf16.mxu0 0
        %997 = vmatpush2.bf16.xpose.msra.mxu0 0
        %998 = vmatprep.subr.bf16.mxu0 0
        %999 = vmatpush2.bf16.xpose.msra.mxu0 0
        %1000 = vmatprep.subr.bf16.mxu0 0
        %1001 = vmatpush2.bf16.xpose.msra.mxu0 0
        %1002 = vmatprep.subr.bf16.mxu0 0
        %1003 = vmatpush2.bf16.xpose.msra.mxu0 0
        %1004 = vmatprep.subr.bf16.mxu0 0
        %1005 = vmatpush2.bf16.xpose.msra.mxu0 0
        %1006 = vmatprep.subr.bf16.mxu0 0
        %1007 = vmatpush2.bf16.xpose.msra.mxu0 0
        %1008 = vmatprep.subr.bf16.mxu0 0
        %1009 = vmatpush2.bf16.xpose.msra.mxu0 0
        %1010 = vmatprep.mubr.bf16.mxu0 0
        %1011 = vmatmul.mubr.bf16.gmra.mxu0 %v973
        %v1012 = vpop.f32.mrf.mxu0
        %v1013 = vadd.f32 0.0, %v1012
        %v1014 = vpop.f32.mrf.mxu0
        %v1015 = vpop.f32.mrf.mxu0
        %v1016 = vpop.f32.mrf.mxu0
        %1017 = vdwg.mxu0
        %v1018 = vsel %vm742, %v1013, -inf
        %v1019 = vsel %vm747, %v1018, -inf
        %1020 = vmax.xlane.f32.xlu0 %v1019
        %v1021 = vpop.xlane.xlu0 %1020
        %v1022 = vsub.f32 %v1018, %v1021
        %v1023 = vmul.f32 %v1022, 1.442695
        %v1024 = vpow.pop %v1023
        %v1025 = vsel %vm747, %v1024, 0.0
        %1026 = vadd.xlane.f32.xlu0 %v1025
        %v1027 = vpop.xlane.xlu0 %1026
        %v1028 = vpack.c.bf16 %v1024, %v1024
        %1029 = vrot.lane.b32.xlu0 %v746, 112
        %v1030 = vpop.permute.xlu0 %1029
        %v1032 = vsel %vm747, %v1028, 0
        %v1035 = vsel %vm808, %v1030, 0
        %1037 = vmatprep.subr.bf16.mxu0 0
        %1038 = vmatpush1.bf16.msra.mxu0 0
        %1039 = vmatprep.subr.bf16.mxu0 0
        %1040 = vmatpush1.bf16.msra.mxu0 0
        %1041 = vmatprep.subr.bf16.mxu0 0
        %1042 = vmatpush1.bf16.msra.mxu0 0
        %1043 = vmatprep.subr.bf16.mxu0 0
        %1044 = vmatpush1.bf16.msra.mxu0 0
        %1045 = vmatprep.subr.bf16.mxu0 0
        %1046 = vmatpush1.bf16.msra.mxu0 0
        %1047 = vmatprep.subr.bf16.mxu0 0
        %1048 = vmatpush1.bf16.msra.mxu0 0
        %1049 = vmatprep.subr.bf16.mxu0 0
        %1050 = vmatpush1.bf16.msra.mxu0 0
        %1051 = vmatprep.subr.bf16.mxu0 0
        %1052 = vmatpush1.bf16.msra.mxu0 %v1035
        %1053 = vmatprep.subr.bf16.mxu0 0
        %1054 = vmatpush2.bf16.msra.mxu0 0
        %1055 = vmatprep.subr.bf16.mxu0 0
        %1056 = vmatpush2.bf16.msra.mxu0 0
        %1057 = vmatprep.subr.bf16.mxu0 0
        %1058 = vmatpush2.bf16.msra.mxu0 0
        %1059 = vmatprep.subr.bf16.mxu0 0
        %1060 = vmatpush2.bf16.msra.mxu0 0
        %1061 = vmatprep.subr.bf16.mxu0 0
        %1062 = vmatpush2.bf16.msra.mxu0 0
        %1063 = vmatprep.subr.bf16.mxu0 0
        %1064 = vmatpush2.bf16.msra.mxu0 0
        %1065 = vmatprep.subr.bf16.mxu0 0
        %1066 = vmatpush2.bf16.msra.mxu0 0
        %1067 = vmatprep.subr.bf16.mxu0 0
        %1068 = vmatpush2.bf16.msra.mxu0 0
        %1069 = vmatprep.mubr.bf16.mxu0 0
        %1070 = vmatmul.mubr.bf16.gmra.mxu0 %v1032
        %v1071 = vpop.f32.mrf.mxu0
        %v1072 = vadd.f32 0.0, %v1071
        %v1073 = vpop.f32.mrf.mxu0
        %v1074 = vpop.f32.mrf.mxu0
        %v1075 = vpop.f32.mrf.mxu0
        %1076 = vdwg.mxu0
        %v1077 = vrcp.pop %v1027
        %v1078 = vmul.f32 %v1072, %v1077
        %1079 = vrot.lane.b32.xlu0 %v744, 104
        %v1080 = vpop.permute.xlu0 %1079
        %1081 = vrot.lane.b32.xlu0 %v745, 104
        %v1082 = vpop.permute.xlu0 %1081
        %v1084 = vsel %vm747, %v1080, 0
        %v1087 = vsel %vm747, %v1082, 0
        %1089 = vmatprep.subr.bf16.mxu0 0
        %1090 = vmatpush1.bf16.xpose.msra.mxu0 0
        %1091 = vmatprep.subr.bf16.mxu0 0
        %1092 = vmatpush1.bf16.xpose.msra.mxu0 0
        %1093 = vmatprep.subr.bf16.mxu0 0
        %1094 = vmatpush1.bf16.xpose.msra.mxu0 0
        %1095 = vmatprep.subr.bf16.mxu0 0
        %1096 = vmatpush1.bf16.xpose.msra.mxu0 0
        %1097 = vmatprep.subr.bf16.mxu0 0
        %1098 = vmatpush1.bf16.xpose.msra.mxu0 0
        %1099 = vmatprep.subr.bf16.mxu0 0
        %1100 = vmatpush1.bf16.xpose.msra.mxu0 0
        %1101 = vmatprep.subr.bf16.mxu0 0
        %1102 = vmatpush1.bf16.xpose.msra.mxu0 0
        %1103 = vmatprep.subr.bf16.mxu0 0
        %1104 = vmatpush1.bf16.xpose.msra.mxu0 %v1087
        %1105 = vmatprep.subr.bf16.mxu0 0
        %1106 = vmatpush2.bf16.xpose.msra.mxu0 0
        %1107 = vmatprep.subr.bf16.mxu0 0
        %1108 = vmatpush2.bf16.xpose.msra.mxu0 0
        %1109 = vmatprep.subr.bf16.mxu0 0
        %1110 = vmatpush2.bf16.xpose.msra.mxu0 0
        %1111 = vmatprep.subr.bf16.mxu0 0
        %1112 = vmatpush2.bf16.xpose.msra.mxu0 0
        %1113 = vmatprep.subr.bf16.mxu0 0
        %1114 = vmatpush2.bf16.xpose.msra.mxu0 0
        %1115 = vmatprep.subr.bf16.mxu0 0
        %1116 = vmatpush2.bf16.xpose.msra.mxu0 0
        %1117 = vmatprep.subr.bf16.mxu0 0
        %1118 = vmatpush2.bf16.xpose.msra.mxu0 0
        %1119 = vmatprep.subr.bf16.mxu0 0
        %1120 = vmatpush2.bf16.xpose.msra.mxu0 0
        %1121 = vmatprep.mubr.bf16.mxu0 0
        %1122 = vmatmul.mubr.bf16.gmra.mxu0 %v1084
        %v1123 = vpop.f32.mrf.mxu0
        %v1124 = vadd.f32 0.0, %v1123
        %v1125 = vpop.f32.mrf.mxu0
        %v1126 = vpop.f32.mrf.mxu0
        %v1127 = vpop.f32.mrf.mxu0
        %1128 = vdwg.mxu0
        %v1129 = vsel %vm742, %v1124, -inf
        %v1130 = vsel %vm747, %v1129, -inf
        %1131 = vmax.xlane.f32.xlu0 %v1130
        %v1132 = vpop.xlane.xlu0 %1131
        %v1133 = vsub.f32 %v1129, %v1132
        %v1134 = vmul.f32 %v1133, 1.442695
        %v1135 = vpow.pop %v1134
        %v1136 = vsel %vm747, %v1135, 0.0
        %1137 = vadd.xlane.f32.xlu0 %v1136
        %v1138 = vpop.xlane.xlu0 %1137
        %v1139 = vpack.c.bf16 %v1135, %v1135
        %1140 = vrot.lane.b32.xlu0 %v746, 104
        %v1141 = vpop.permute.xlu0 %1140
        %v1143 = vsel %vm747, %v1139, 0
        %v1146 = vsel %vm808, %v1141, 0
        %1148 = vmatprep.subr.bf16.mxu0 0
        %1149 = vmatpush1.bf16.msra.mxu0 0
        %1150 = vmatprep.subr.bf16.mxu0 0
        %1151 = vmatpush1.bf16.msra.mxu0 0
        %1152 = vmatprep.subr.bf16.mxu0 0
        %1153 = vmatpush1.bf16.msra.mxu0 0
        %1154 = vmatprep.subr.bf16.mxu0 0
        %1155 = vmatpush1.bf16.msra.mxu0 0
        %1156 = vmatprep.subr.bf16.mxu0 0
        %1157 = vmatpush1.bf16.msra.mxu0 0
        %1158 = vmatprep.subr.bf16.mxu0 0
        %1159 = vmatpush1.bf16.msra.mxu0 0
        %1160 = vmatprep.subr.bf16.mxu0 0
        %1161 = vmatpush1.bf16.msra.mxu0 0
        %1162 = vmatprep.subr.bf16.mxu0 0
        %1163 = vmatpush1.bf16.msra.mxu0 %v1146
        %1164 = vmatprep.subr.bf16.mxu0 0
        %1165 = vmatpush2.bf16.msra.mxu0 0
        %1166 = vmatprep.subr.bf16.mxu0 0
        %1167 = vmatpush2.bf16.msra.mxu0 0
        %1168 = vmatprep.subr.bf16.mxu0 0
        %1169 = vmatpush2.bf16.msra.mxu0 0
        %1170 = vmatprep.subr.bf16.mxu0 0
        %1171 = vmatpush2.bf16.msra.mxu0 0
        %1172 = vmatprep.subr.bf16.mxu0 0
        %1173 = vmatpush2.bf16.msra.mxu0 0
        %1174 = vmatprep.subr.bf16.mxu0 0
        %1175 = vmatpush2.bf16.msra.mxu0 0
        %1176 = vmatprep.subr.bf16.mxu0 0
        %1177 = vmatpush2.bf16.msra.mxu0 0
        %1178 = vmatprep.subr.bf16.mxu0 0
        %1179 = vmatpush2.bf16.msra.mxu0 0
        %1180 = vmatprep.mubr.bf16.mxu0 0
        %1181 = vmatmul.mubr.bf16.gmra.mxu0 %v1143
        %v1182 = vpop.f32.mrf.mxu0
        %v1183 = vadd.f32 0.0, %v1182
        %v1184 = vpop.f32.mrf.mxu0
        %v1185 = vpop.f32.mrf.mxu0
        %v1186 = vpop.f32.mrf.mxu0
        %1187 = vdwg.mxu0
        %v1188 = vrcp.pop %v1138
        %v1189 = vmul.f32 %v1183, %v1188
        %1191 = vrot.lane.b32.xlu0 %v967, 8
        %v1192 = vpop.permute.xlu0 %1191
        %1195 = vrot.lane.b32.xlu0 %v1078, 16
        %v1196 = vpop.permute.xlu0 %1195
        %1199 = vrot.lane.b32.xlu0 %v1189, 24
        %v1200 = vpop.permute.xlu0 %1199
        %v1202 = vsel %vm747, %v853, %v1192
        %vm1203 = vcmask 130048
        %v1204 = vsel %vm1203, %v1202, %v1196
        %vm1205 = vcmask 195584
        %v1206 = vsel %vm1205, %v1204, %v1200
        %v1207 = vpack.c.bf16 %v1206, %v1206
        %v1208 = vld [vmem:[%s8] sm:$0xf]
        %v1209 = vld [vmem:[%s8 + $0x4] sm:$0xf]
        %v1210 = vld [vmem:[%s8 + $0x8] sm:$0xf]
        %v1211 = vld [vmem:[%s8 + $0xc] sm:$0xf]
        %v1212 = vld [vmem:[%s9] sm:$0x1]
        %v1214 = vlaneseq
        %v1215 = vshrl.u32 %v1214, 7
        %v1216 = vsub.s32 0, %v1215
        %v1217 = vrot.slane %v1212, %v1216
        %v1223 = vunpack.c.l.b16 %v1208
        %v1224 = vunpack.c.l.b16 %v1209
        %v1225 = vunpack.c.l.b16 %v1210
        %v1226 = vunpack.c.l.b16 %v1211
        %v1227 = vpack.c.b16 %v1224, %v1223
        %v1228 = vpack.c.b16 %v1226, %v1225
        %v1232 = vsel %vm512, %v1207, 0
        %1234 = vmatprep.subr.bf16.mxu0 0
        %1235 = vmatpush1.bf16.msra.mxu0 0
        %1236 = vmatprep.subr.bf16.mxu0 0
        %1237 = vmatpush1.bf16.msra.mxu0 0
        %1238 = vmatprep.subr.bf16.mxu0 0
        %1239 = vmatpush1.bf16.msra.mxu0 0
        %1240 = vmatprep.subr.bf16.mxu0 0
        %1241 = vmatpush1.bf16.msra.mxu0 0
        %1242 = vmatprep.subr.bf16.mxu0 0
        %1243 = vmatpush1.bf16.msra.mxu0 0
        %1244 = vmatprep.subr.bf16.mxu0 0
        %1245 = vmatpush1.bf16.msra.mxu0 0
        %1246 = vmatprep.subr.bf16.mxu0 0
        %1247 = vmatpush1.bf16.msra.mxu0 %v1228
        %1248 = vmatprep.subr.bf16.mxu0 0
        %1249 = vmatpush1.bf16.msra.mxu0 %v1227
        %1250 = vmatprep.subr.bf16.mxu0 0
        %1251 = vmatpush2.bf16.msra.mxu0 0
        %1252 = vmatprep.subr.bf16.mxu0 0
        %1253 = vmatpush2.bf16.msra.mxu0 0
        %1254 = vmatprep.subr.bf16.mxu0 0
        %1255 = vmatpush2.bf16.msra.mxu0 0
        %1256 = vmatprep.subr.bf16.mxu0 0
        %1257 = vmatpush2.bf16.msra.mxu0 0
        %1258 = vmatprep.subr.bf16.mxu0 0
        %1259 = vmatpush2.bf16.msra.mxu0 0
        %1260 = vmatprep.subr.bf16.mxu0 0
        %1261 = vmatpush2.bf16.msra.mxu0 0
        %1262 = vmatprep.subr.bf16.mxu0 0
        %1263 = vmatpush2.bf16.msra.mxu0 0
        %1264 = vmatprep.subr.bf16.mxu0 0
        %1265 = vmatpush2.bf16.msra.mxu0 0
        %1266 = vmatprep.mubr.bf16.mxu0 0
        %1267 = vmatmul.mubr.bf16.gmra.mxu0 %v1232
        %v1268 = vpop.f32.mrf.mxu0
        %v1269 = vadd.f32 %v1217, %v1268
        %v1270 = vpop.f32.mrf.mxu0
        %v1271 = vpop.f32.mrf.mxu0
        %v1272 = vpop.f32.mrf.mxu0
        %1273 = vdwg.mxu0
        %v1274 = vadd.f32 %v508, %v1269
        %v1275 = vld [vmem:[%s3] sm:$0x1]
        %v1276 = vld [vmem:[%s4] sm:$0x1]
        %v1277 = vsel %vm512, %v1274, 0.0
        %1278 = vadd.xlane.f32.xlu0 %v1277
        %v1279 = vpop.xlane.xlu0 %1278
        %v1280 = vmul.f32 %v1279, %v516
        %v1281 = vmul.f32 %v1274, %v1274
        %v1282 = vsel %vm512, %v1281, 0.0
        %1283 = vadd.xlane.f32.xlu0 %v1282
        %v1284 = vpop.xlane.xlu0 %1283
        %v1285 = vmul.f32 %v1284, %v516
        %v1286 = vmul.f32 %v1280, %v1280
        %v1287 = vsub.f32 %v1285, %v1286
        %v1288 = vsub.f32 %v1274, %v1280
        %v1289 = vadd.f32 %v1287, 1e-05
        %v1290 = vrsqrt.pop %v1289
        %v1291 = vmul.f32 %v1288, %v1290
        %v1293 = vlaneseq
        %v1294 = vshrl.u32 %v1293, 7
        %v1295 = vsub.s32 0, %v1294
        %v1296 = vrot.slane %v1275, %v1295
        %v1298 = vmul.f32 %v1291, %v1296
        %v1300 = vlaneseq
        %v1301 = vshrl.u32 %v1300, 7
        %v1302 = vsub.s32 0, %v1301
        %v1303 = vrot.slane %v1276, %v1302
        %v1305 = vadd.f32 %v1298, %v1303
        %v1306 = vpack.c.bf16 %v1305, %v1305
        %v1307 = vld [vmem:[#allocation2] sm:$0xf]
        %v1308 = vld [vmem:[#allocation2 + $0x4] sm:$0xf]
        %v1309 = vld [vmem:[#allocation2 + $0x8] sm:$0xf]
        %v1310 = vld [vmem:[#allocation2 + $0xc] sm:$0xf]
        %v1311 = vld [vmem:[#allocation5] sm:$0x1]
        %v1313 = vlaneseq
        %v1314 = vshrl.u32 %v1313, 7
        %v1315 = vsub.s32 0, %v1314
        %v1316 = vrot.slane %v1311, %v1315
        %v1322 = vunpack.c.l.b16 %v1307
        %v1323 = vunpack.c.l.b16 %v1308
        %v1324 = vunpack.c.l.b16 %v1309
        %v1325 = vunpack.c.l.b16 %v1310
        %v1326 = vpack.c.b16 %v1323, %v1322
        %v1327 = vpack.c.b16 %v1325, %v1324
        %v1331 = vsel %vm512, %v1306, 0
        %1333 = vmatprep.subr.bf16.mxu0 0
        %1334 = vmatpush1.bf16.msra.mxu0 0
        %1335 = vmatprep.subr.bf16.mxu0 0
        %1336 = vmatpush1.bf16.msra.mxu0 0
        %1337 = vmatprep.subr.bf16.mxu0 0
        %1338 = vmatpush1.bf16.msra.mxu0 0
        %1339 = vmatprep.subr.bf16.mxu0 0
        %1340 = vmatpush1.bf16.msra.mxu0 0
        %1341 = vmatprep.subr.bf16.mxu0 0
        %1342 = vmatpush1.bf16.msra.mxu0 0
        %1343 = vmatprep.subr.bf16.mxu0 0
        %1344 = vmatpush1.bf16.msra.mxu0 0
        %1345 = vmatprep.subr.bf16.mxu0 0
        %1346 = vmatpush1.bf16.msra.mxu0 %v1327
        %1347 = vmatprep.subr.bf16.mxu0 0
        %1348 = vmatpush1.bf16.msra.mxu0 %v1326
        %1349 = vmatprep.subr.bf16.mxu0 0
        %1350 = vmatpush2.bf16.msra.mxu0 0
        %1351 = vmatprep.subr.bf16.mxu0 0
        %1352 = vmatpush2.bf16.msra.mxu0 0
        %1353 = vmatprep.subr.bf16.mxu0 0
        %1354 = vmatpush2.bf16.msra.mxu0 0
        %1355 = vmatprep.subr.bf16.mxu0 0
        %1356 = vmatpush2.bf16.msra.mxu0 0
        %1357 = vmatprep.subr.bf16.mxu0 0
        %1358 = vmatpush2.bf16.msra.mxu0 0
        %1359 = vmatprep.subr.bf16.mxu0 0
        %1360 = vmatpush2.bf16.msra.mxu0 0
        %1361 = vmatprep.subr.bf16.mxu0 0
        %1362 = vmatpush2.bf16.msra.mxu0 0
        %1363 = vmatprep.subr.bf16.mxu0 0
        %1364 = vmatpush2.bf16.msra.mxu0 0
        %1365 = vmatprep.mubr.bf16.mxu0 0
        %1366 = vmatmul.mubr.bf16.gmra.mxu0 %v1331
        %v1367 = vpop.f32.mrf.mxu0
        %v1368 = vadd.f32 %v1316, %v1367
        %v1369 = vpop.f32.mrf.mxu0
        %v1370 = vpop.f32.mrf.mxu0
        %v1371 = vpop.f32.mrf.mxu0
        %1372 = vdwg.mxu0
        %v1373 = vmax.f32 %v1368, 0.0
        %v1374 = vpack.c.bf16 %v1373, %v1373
        %v1375 = vld [vmem:[%s12] sm:$0xf]
        %v1376 = vld [vmem:[%s12 + $0x4] sm:$0xf]
        %v1377 = vld [vmem:[%s12 + $0x8] sm:$0xf]
        %v1378 = vld [vmem:[%s12 + $0xc] sm:$0xf]
        %v1379 = vld [vmem:[%s12 + $0x10] sm:$0xf]
        %v1380 = vld [vmem:[%s12 + $0x14] sm:$0xf]
        %v1381 = vld [vmem:[%s12 + $0x18] sm:$0xf]
        %v1382 = vld [vmem:[%s12 + $0x1c] sm:$0xf]
        %v1383 = vld [vmem:[%s12 + $0x20] sm:$0xf]
        %v1384 = vld [vmem:[%s12 + $0x24] sm:$0xf]
        %v1385 = vld [vmem:[%s12 + $0x28] sm:$0xf]
        %v1386 = vld [vmem:[%s12 + $0x2c] sm:$0xf]
        %v1387 = vld [vmem:[%s12 + $0x30] sm:$0xf]
        %v1388 = vld [vmem:[%s12 + $0x34] sm:$0xf]
        %v1389 = vld [vmem:[%s12 + $0x38] sm:$0xf]
        %v1390 = vld [vmem:[%s12 + $0x3c] sm:$0xf]
        %v1407 = vunpack.c.l.b16 %v1375
        %v1408 = vunpack.c.l.b16 %v1376
        %v1409 = vunpack.c.l.b16 %v1377
        %v1410 = vunpack.c.l.b16 %v1378
        %v1411 = vunpack.c.l.b16 %v1379
        %v1412 = vunpack.c.l.b16 %v1380
        %v1413 = vunpack.c.l.b16 %v1381
        %v1414 = vunpack.c.l.b16 %v1382
        %v1415 = vunpack.c.l.b16 %v1383
        %v1416 = vunpack.c.l.b16 %v1384
        %v1417 = vunpack.c.l.b16 %v1385
        %v1418 = vunpack.c.l.b16 %v1386
        %v1419 = vunpack.c.l.b16 %v1387
        %v1420 = vunpack.c.l.b16 %v1388
        %v1421 = vunpack.c.l.b16 %v1389
        %v1422 = vunpack.c.l.b16 %v1390
        %v1423 = vpack.c.b16 %v1408, %v1407
        %v1424 = vpack.c.b16 %v1410, %v1409
        %v1425 = vpack.c.b16 %v1412, %v1411
        %v1426 = vpack.c.b16 %v1414, %v1413
        %v1427 = vpack.c.b16 %v1416, %v1415
        %v1428 = vpack.c.b16 %v1418, %v1417
        %v1429 = vpack.c.b16 %v1420, %v1419
        %v1430 = vpack.c.b16 %v1422, %v1421
        %1439 = vmatprep.subr.bf16.mxu0 0
        %1440 = vmatpush1.bf16.msra.mxu0 %v1430
        %1441 = vmatprep.subr.bf16.mxu0 0
        %1442 = vmatpush1.bf16.msra.mxu0 %v1429
        %1443 = vmatprep.subr.bf16.mxu0 0
        %1444 = vmatpush1.bf16.msra.mxu0 %v1428
        %1445 = vmatprep.subr.bf16.mxu0 0
        %1446 = vmatpush1.bf16.msra.mxu0 %v1427
        %1447 = vmatprep.subr.bf16.mxu0 0
        %1448 = vmatpush1.bf16.msra.mxu0 %v1426
        %1449 = vmatprep.subr.bf16.mxu0 0
        %1450 = vmatpush1.bf16.msra.mxu0 %v1425
        %1451 = vmatprep.subr.bf16.mxu0 0
        %1452 = vmatpush1.bf16.msra.mxu0 %v1424
        %1453 = vmatprep.subr.bf16.mxu0 0
        %1454 = vmatpush1.bf16.msra.mxu0 %v1423
        %1455 = vmatprep.subr.bf16.mxu0 0
        %1456 = vmatpush2.bf16.msra.mxu0 0
        %1457 = vmatprep.subr.bf16.mxu0 0
        %1458 = vmatpush2.bf16.msra.mxu0 0
        %1459 = vmatprep.subr.bf16.mxu0 0
        %1460 = vmatpush2.bf16.msra.mxu0 0
        %1461 = vmatprep.subr.bf16.mxu0 0
        %1462 = vmatpush2.bf16.msra.mxu0 0
        %1463 = vmatprep.subr.bf16.mxu0 0
        %1464 = vmatpush2.bf16.msra.mxu0 0
        %1465 = vmatprep.subr.bf16.mxu0 0
        %1466 = vmatpush2.bf16.msra.mxu0 0
        %1467 = vmatprep.subr.bf16.mxu0 0
        %1468 = vmatpush2.bf16.msra.mxu0 0
        %1469 = vmatprep.subr.bf16.mxu0 0
        %1470 = vmatpush2.bf16.msra.mxu0 0
        %1471 = vmatprep.mubr.bf16.mxu0 0
        %1472 = vmatmul.mubr.bf16.gmra.mxu0 %v1374
        %v1473 = vpop.f32.mrf.mxu0
        %v1474 = vadd.f32 0.0, %v1473
        %v1475 = vpop.f32.mrf.mxu0
        %v1476 = vpop.f32.mrf.mxu0
        %v1477 = vpop.f32.mrf.mxu0
        %1478 = vdwg.mxu0
        %v1479 = vadd.f32 %v1274, %v1474
        %v1480 = vld [vmem:[%s13] sm:$0x1]
        %v1482 = vlaneseq
        %v1483 = vshrl.u32 %v1482, 7
        %v1484 = vsub.s32 0, %v1483
        %v1485 = vrot.slane %v1480, %v1484
        %v1487 = vadd.f32 %v1479, %v1485
        %1488 = vst.msk [vmem:[%s500] sm:$0xff] %vm512, %v1487
        %s1489 = sand.u32 %s351, 1
        %s1490 = scalar_lea.sflag [#allocation4], %s1489
        %s1491 = sand.u32 %s351, 1
        %s1492 = smul.addr %s1491, 8
        %s1493 = scalar_lea.vmem [#allocation7], %s1492
        // Predicated region
        $region85: #{tpu_custom_call.1} parent=75 // pred_check
          %p1494 = pneg %p361
        $region86: #{tpu_custom_call.1} parent=75 // pred_check_branch
          %1496 = sbr.rel (%p1494) target = $region88
        $region87: #{tpu_custom_call.1} parent=75 // pred_region
          %s1498 = ssub.s32 128, 128
          %1499 = vsyncadd %s1490, %s1498
          %s1500 = sadd.s32 %s35, %s34
          %s1501 = smul.addr %s1500, 128
          %s1502 = scalar_lea.hbm %s14, %s1501
          %s1504 = sshll.u32 %s1493, 4
          %s1505 = int_to_ptr.vmem [resolvable:$true] %s1504
          %1507 = dma.vmem_to_hbm [thread:$0]  %s1505, 128, %s1502, %s1490
        $region88: #{tpu_custom_call.1} parent=75 // pred_fallthru
          _
      $region76: #{tpu_custom_call.1} parent=5 // pred_fallthru
        _
      %p1508 = scmp.le.s32.totalorder 2, %s25
      // Predicated region
      $region89: #{tpu_custom_call.1} parent=5 // pred_check
        %p1509 = pneg %p1508
      $region90: #{tpu_custom_call.1} parent=5 // pred_check_branch
        %1511 = sbr.rel (%p1509) target = $region92
      $region91: #{tpu_custom_call.1} parent=5 // pred_region
        %s1512 = ssub.s32 %s25, 2
        // Predicated region
        $region93: #{tpu_custom_call.1} parent=91 // pred_check
          %p1513 = pneg %p367
        $region94: #{tpu_custom_call.1} parent=91 // pred_check_branch
          %1515 = sbr.rel (%p1513) target = $region96
        $region95: #{tpu_custom_call.1} parent=91 // pred_region
          %s1516 = sand.u32 %s352, 1
          %s1517 = scalar_lea.sflag [#allocation4], %s1516
          %s1518 = sand.u32 %s352, 1
          %s1519 = smul.addr %s1518, 8
          %s1520 = scalar_lea.vmem [#allocation7], %s1519
          %1521 = dma.done %s1517, 128
        $region96: #{tpu_custom_call.1} parent=91 // pred_fallthru
          _
      $region92: #{tpu_custom_call.1} parent=5 // pred_fallthru
        _
    $region6: #{tpu_custom_call.1} parent=1 // loop_footer
      %s29 = sadd.s32 1, %s25
    $region7: #{tpu_custom_call.1} parent=1 // loop_footer_branch
      %24 = sbr.rel target = $region3
    $region8: #{tpu_custom_call.1} parent=1 // loop_exit
      _
    %1522 = vsyncpa [#allocation3], 1
    %s1523 = scalar_lea.sflag [#allocation3], 1
    %1524 = vsyncpa %s1523, 1
    %1525 = vsyncpa [#allocation6], 1
    %1526 = vsyncpa [#allocation4], 1
    %s1527 = scalar_lea.sflag [#allocation4], 1
    %1528 = vsyncpa %s1527, 1

</llo_original>
